<compile_context>
chip_gen: v6e
topology: v6e:2x2x1
jax: 0.10.0
libtpu: 0.0.40
codegen_flags: <defaults>
</compile_context>

<pallas_src>
import functools

import jax
import jax.numpy as jnp
from jax.experimental import pallas as pl
from jax.experimental.pallas import tpu as pltpu

PACK = 8  # batch rows packed per sublane row (8 * input_dim = 128 lanes for input_dim=16)


def _round_up(n, m):
    return ((n + m - 1) // m) * m


def _fcnn_kernel(x_ref, w1_ref, b1_ref, w2_ref, b2_ref, w3_ref, b3_ref, o_ref,
                 *, chunk_rows, num_chunks):
    # Weights/biases are tiny, constant index_map -> DMA'd once and VMEM-resident.
    w1 = w1_ref[...]          # (PACK*D, PACK*64) bf16, block-diagonal
    b1 = b1_ref[...]          # (1, PACK*64) f32
    w2 = w2_ref[...]          # (PACK*64, PACK*32) bf16, block-diagonal
    b2 = b2_ref[...]          # (1, PACK*32) f32
    w3 = w3_ref[...]          # (PACK*32, PACK) bf16, block-diagonal (w3 column blocks)
    b3 = b3_ref[...]          # (1, 1) f32

    def chunk(c, carry):
        r = pl.multiple_of(c * chunk_rows, chunk_rows)
        xs = x_ref[pl.ds(r, chunk_rows), :]                      # (TC, PACK*D) bf16

        # Layer 1: Linear(D,64) + ReLU (packed block-diag, bf16 operands, f32 accumulate).
        h1 = jnp.dot(xs, w1, preferred_element_type=jnp.float32) + b1
        h1 = jnp.maximum(h1, 0.0).astype(jnp.bfloat16)

        # Dropout(0.2): identity at inference time (model.eval()).
        # TODO(synk): training-mode dropout (pltpu.prng_random_bits mask + 1/0.8 rescale).

        # Layer 2: Linear(64,32) + ReLU.
        h2 = jnp.dot(h1, w2, preferred_element_type=jnp.float32) + b2
        h2 = jnp.maximum(h2, 0.0).astype(jnp.bfloat16)

        # Layer 3: Linear(32,1) for all PACK packed sub-rows at once -> (TC, PACK).
        out = jnp.dot(h2, w3, preferred_element_type=jnp.float32) + b3
        o_ref[pl.ds(r, chunk_rows), :] = out.astype(o_ref.dtype)
        return carry

    jax.lax.fori_loop(0, num_chunks, chunk, None, unroll=2)


def fcnn_forward(x, params, *, block_rows=2048, chunk_rows=256):
    """x: (B, input_dim) float32. Returns (B, 1) float32 (inference forward pass)."""
    w1, b1, w2, b2, w3, b3 = params
    B, D = x.shape
    P = PACK

    # --- parameter packing: block-diagonal weights so P rows share one sublane row ---
    eye = jnp.eye(P, dtype=jnp.float32)
    w1_bd = jnp.kron(eye, w1).astype(jnp.bfloat16)        # (P*D, P*64)
    w2_bd = jnp.kron(eye, w2).astype(jnp.bfloat16)        # (P*64, P*32)
    w3_bd = jnp.kron(eye, w3.T).astype(jnp.bfloat16)      # (P*32, P)
    b1_t = jnp.tile(b1, (1, P)).astype(jnp.float32)       # (1, P*64)
    b2_t = jnp.tile(b2, (1, P)).astype(jnp.float32)       # (1, P*32)
    b3_f = b3.astype(jnp.float32)                         # (1, 1)

    # --- tile sizes (in packed rows) ---
    tc = _round_up(max(8, _round_up(chunk_rows, P) // P), 8)     # inner chunk (packed rows)
    rows_p = -(-B // P)                                          # packed rows needed
    # cap the tile so there are >=2 grid steps when there is enough work (2 TCs on v7x)
    half = _round_up(-(-rows_p // 2), tc)
    tm = _round_up(max(tc, min(block_rows // P, half)), tc)      # DMA tile (packed rows)
    rows_pad = _round_up(rows_p, tm)
    b_pad = rows_pad * P

    # --- input packing: (B, D) -> (rows_pad, P*D) bf16 (pad+reshape+cast fuse to one pass) ---
    if b_pad != B:
        x = jnp.pad(x, ((0, b_pad - B), (0, 0)))
    x_p = x.reshape(rows_pad, P * D).astype(jnp.bfloat16)

    grid = (rows_pad // tm,)
    num_chunks = tm // tc
    kernel = functools.partial(_fcnn_kernel, chunk_rows=tc, num_chunks=num_chunks)

    const = lambda a: pl.BlockSpec(a.shape, lambda i: (0,) * a.ndim)

    flops = 2 * b_pad * (D * 64 + 64 * 32 + 32)
    bytes_accessed = (b_pad * D * 2 + b_pad * 4
                      + (w1_bd.size + w2_bd.size + w3_bd.size) * 2
                      + (b1_t.size + b2_t.size + b3_f.size) * 4)

    out = pl.pallas_call(
        kernel,
        out_shape=jax.ShapeDtypeStruct((rows_pad, P), jnp.float32),
        grid=grid,
        in_specs=[pl.BlockSpec((tm, P * D), lambda i: (i, 0)),
                  const(w1_bd), const(b1_t), const(w2_bd), const(b2_t),
                  const(w3_bd), const(b3_f)],
        out_specs=pl.BlockSpec((tm, P), lambda i: (i, 0)),
        compiler_params=pltpu.CompilerParams(
            dimension_semantics=("parallel",)),
        cost_estimate=pl.CostEstimate(flops=int(flops), transcendentals=0,
                                      bytes_accessed=int(bytes_accessed)),
    )(x_p, w1_bd, b1_t, w2_bd, b2_t, w3_bd, b3_f)

    # (rows_pad, P): out[i, j] is the result for original row P*i + j -> free reshape.
    return out.reshape(b_pad, 1)[:B]


def init_params(key, input_dim):
    """Deterministic parameter init (shapes match the PyTorch module)."""
    ks = jax.random.split(key, 6)
    w1 = jax.random.normal(ks[0], (input_dim, 64), jnp.float32) * (1.0 / jnp.sqrt(input_dim))
    b1 = jax.random.normal(ks[1], (1, 64), jnp.float32) * 0.01
    w2 = jax.random.normal(ks[2], (64, 32), jnp.float32) * (1.0 / jnp.sqrt(64.0))
    b2 = jax.random.normal(ks[3], (1, 32), jnp.float32) * 0.01
    w3 = jax.random.normal(ks[4], (1, 32), jnp.float32) * (1.0 / jnp.sqrt(32.0))
    b3 = jax.random.normal(ks[5], (1, 1), jnp.float32) * 0.01
    return (w1, b1, w2, b2, w3, b3)


def reference_forward_f32(x, params):
    """Full-precision f32 reference."""
    w1, b1, w2, b2, w3, b3 = params
    hi = jax.lax.Precision.HIGHEST
    h1 = jnp.maximum(jnp.dot(x, w1, precision=hi) + b1, 0.0)
    h2 = jnp.maximum(jnp.dot(h1, w2, precision=hi) + b2, 0.0)
    return jnp.dot(h2, w3.T, precision=hi) + b3


def reference_forward_bf16(x, params):
    """Mimics the kernel numerics: bf16 matmul operands, f32 accumulation."""
    w1, b1, w2, b2, w3, b3 = params
    bf, f32 = jnp.bfloat16, jnp.float32
    h1 = jnp.maximum(jnp.dot(x.astype(bf), w1.astype(bf), preferred_element_type=f32) + b1, 0.0)
    h2 = jnp.maximum(jnp.dot(h1.astype(bf), w2.astype(bf), preferred_element_type=f32) + b2, 0.0)
    return jnp.dot(h2.astype(bf), w3.astype(bf).T, preferred_element_type=f32) + b3


if __name__ == "__main__":
    key = jax.random.PRNGKey(0)
    k_x, k_p = jax.random.split(key)

    # Ragged batch: not a multiple of the 8-row packing nor of the batch tile, so both the
    # packing pad and the tile pad paths are exercised; grid has 2 "parallel" steps.
    batch, input_dim = 1003, 16
    x = jax.random.normal(k_x, (batch, input_dim), jnp.float32)
    params = init_params(k_p, input_dim)

    out = jax.block_until_ready(fcnn_forward(x, params))
    assert out.shape == (batch, 1)

    ref_bf16 = reference_forward_bf16(x, params)   # same numerics as the kernel
    ref_f32 = reference_forward_f32(x, params)     # "true" f32 forward pass
    assert jnp.allclose(out, ref_bf16, atol=2e-3, rtol=2e-3), "mismatch vs bf16 reference"
    assert jnp.allclose(out, ref_f32, atol=5e-2, rtol=5e-2), "mismatch vs f32 reference"

    print("KERNEL_OK")
</pallas_src>

<mosaic_0001>
module attributes {stable_mosaic.version = 11 : i64} {
  func.func @_fcnn_kernel(%arg0: i32, %arg1: memref<64x128xbf16, #tpu.memory_space<vmem>>, %arg2: memref<128x512xbf16, #tpu.memory_space<vmem>>, %arg3: memref<1x512xf32, #tpu.memory_space<vmem>>, %arg4: memref<512x256xbf16, #tpu.memory_space<vmem>>, %arg5: memref<1x256xf32, #tpu.memory_space<vmem>>, %arg6: memref<256x8xbf16, #tpu.memory_space<vmem>>, %arg7: memref<1x1xf32, #tpu.memory_space<vmem>>, %arg8: memref<64x8xf32, #tpu.memory_space<vmem>>) attributes {dimension_semantics = [#tpu.dimension_semantics<parallel>], iteration_bounds = array<i64: 2>, scalar_prefetch = 0 : i64, scratch_operands = 0 : i64, tpu.core_type = #tpu.core_type<tc>, window_params = [{transform_indices = @transform_0, window_bounds = array<i64: 64, 128>}, {pipeline_mode = #tpu.pipeline_mode<synchronous>, transform_indices = @transform_1, window_bounds = array<i64: 128, 512>}, {pipeline_mode = #tpu.pipeline_mode<synchronous>, transform_indices = @transform_2, window_bounds = array<i64: 1, 512>}, {pipeline_mode = #tpu.pipeline_mode<synchronous>, transform_indices = @transform_3, window_bounds = array<i64: 512, 256>}, {pipeline_mode = #tpu.pipeline_mode<synchronous>, transform_indices = @transform_4, window_bounds = array<i64: 1, 256>}, {pipeline_mode = #tpu.pipeline_mode<synchronous>, transform_indices = @transform_5, window_bounds = array<i64: 256, 8>}, {pipeline_mode = #tpu.pipeline_mode<synchronous>, transform_indices = @transform_6, window_bounds = array<i64: 1, 1>}, {transform_indices = @transform_7, window_bounds = array<i64: 64, 8>}]} {
    %c0 = arith.constant 0 : index
    %c0_0 = arith.constant 0 : index
    %0 = vector.load %arg2[%c0, %c0_0] : memref<128x512xbf16, #tpu.memory_space<vmem>>, vector<128x512xbf16>
    %c0_1 = arith.constant 0 : index
    %c0_2 = arith.constant 0 : index
    %1 = vector.load %arg3[%c0_1, %c0_2] : memref<1x512xf32, #tpu.memory_space<vmem>>, vector<1x512xf32>
    %c0_3 = arith.constant 0 : index
    %c0_4 = arith.constant 0 : index
    %2 = vector.load %arg4[%c0_3, %c0_4] : memref<512x256xbf16, #tpu.memory_space<vmem>>, vector<512x256xbf16>
    %c0_5 = arith.constant 0 : index
    %c0_6 = arith.constant 0 : index
    %3 = vector.load %arg5[%c0_5, %c0_6] : memref<1x256xf32, #tpu.memory_space<vmem>>, vector<1x256xf32>
    %c0_7 = arith.constant 0 : index
    %c0_8 = arith.constant 0 : index
    %4 = vector.load %arg6[%c0_7, %c0_8] : memref<256x8xbf16, #tpu.memory_space<vmem>>, vector<256x8xbf16>
    %c0_9 = arith.constant 0 : index
    %c0_10 = arith.constant 0 : index
    %5 = vector.load %arg7[%c0_9, %c0_10] : memref<1x1xf32, #tpu.memory_space<vmem>>, vector<1x1xf32>
    %c0_i32 = arith.constant 0 : i32
    %c32_i32 = arith.constant 32 : i32
    %6 = arith.muli %c0_i32, %c32_i32 : i32
    %7 = tpu.assume_multiple %6, 32 : i32
    %8 = arith.index_cast %7 : i32 to index
    %c0_11 = arith.constant 0 : index
    %9 = vector.load %arg1[%8, %c0_11] : memref<64x128xbf16, #tpu.memory_space<vmem>>, vector<32x128xbf16>
    %cst = arith.constant dense<0.000000e+00> : vector<32x512xf32>
    %10 = tpu.matmul %9, %0, %cst {dimension_numbers = #tpu.dot_dimension_numbers<[1], [0], [0], [1], [0, 0, 1, 1], [], []>} : vector<32x128xbf16>, vector<128x512xbf16>, vector<32x512xf32> -> vector<32x512xf32>
    %11 = vector.broadcast %1 : vector<1x512xf32> to vector<32x512xf32>
    %12 = arith.addf %10, %11 : vector<32x512xf32>
    %cst_12 = arith.constant 0.000000e+00 : f32
    %13 = vector.broadcast %cst_12 : f32 to vector<32x512xf32>
    %14 = arith.maximumf %12, %13 : vector<32x512xf32>
    %15 = arith.truncf %14 : vector<32x512xf32> to vector<32x512xbf16>
    %cst_13 = arith.constant dense<0.000000e+00> : vector<32x256xf32>
    %16 = tpu.matmul %15, %2, %cst_13 {dimension_numbers = #tpu.dot_dimension_numbers<[1], [0], [0], [1], [0, 0, 1, 1], [], []>} : vector<32x512xbf16>, vector<512x256xbf16>, vector<32x256xf32> -> vector<32x256xf32>
    %17 = vector.broadcast %3 : vector<1x256xf32> to vector<32x256xf32>
    %18 = arith.addf %16, %17 : vector<32x256xf32>
    %cst_14 = arith.constant 0.000000e+00 : f32
    %19 = vector.broadcast %cst_14 : f32 to vector<32x256xf32>
    %20 = arith.maximumf %18, %19 : vector<32x256xf32>
    %21 = arith.truncf %20 : vector<32x256xf32> to vector<32x256xbf16>
    %cst_15 = arith.constant dense<0.000000e+00> : vector<32x8xf32>
    %22 = tpu.matmul %21, %4, %cst_15 {dimension_numbers = #tpu.dot_dimension_numbers<[1], [0], [0], [1], [0, 0, 1, 1], [], []>} : vector<32x256xbf16>, vector<256x8xbf16>, vector<32x8xf32> -> vector<32x8xf32>
    %23 = vector.broadcast %5 : vector<1x1xf32> to vector<32x8xf32>
    %24 = arith.addf %22, %23 : vector<32x8xf32>
    %25 = arith.index_cast %7 : i32 to index
    %c0_16 = arith.constant 0 : index
    %26 = vector.load %arg8[%25, %c0_16] : memref<64x8xf32, #tpu.memory_space<vmem>>, vector<32x8xf32>
    tpu.vector_store %arg8[%25, %c0_16], %24 {strides = array<i32>} : memref<64x8xf32, #tpu.memory_space<vmem>>, vector<32x8xf32>,
    %c1_i32 = arith.constant 1 : i32
    %c32_i32_17 = arith.constant 32 : i32
    %27 = arith.muli %c1_i32, %c32_i32_17 : i32
    %28 = tpu.assume_multiple %27, 32 : i32
    %29 = arith.index_cast %28 : i32 to index
    %c0_18 = arith.constant 0 : index
    %30 = vector.load %arg1[%29, %c0_18] : memref<64x128xbf16, #tpu.memory_space<vmem>>, vector<32x128xbf16>
    %cst_19 = arith.constant dense<0.000000e+00> : vector<32x512xf32>
    %31 = tpu.matmul %30, %0, %cst_19 {dimension_numbers = #tpu.dot_dimension_numbers<[1], [0], [0], [1], [0, 0, 1, 1], [], []>} : vector<32x128xbf16>, vector<128x512xbf16>, vector<32x512xf32> -> vector<32x512xf32>
    %32 = vector.broadcast %1 : vector<1x512xf32> to vector<32x512xf32>
    %33 = arith.addf %31, %32 : vector<32x512xf32>
    %cst_20 = arith.constant 0.000000e+00 : f32
    %34 = vector.broadcast %cst_20 : f32 to vector<32x512xf32>
    %35 = arith.maximumf %33, %34 : vector<32x512xf32>
    %36 = arith.truncf %35 : vector<32x512xf32> to vector<32x512xbf16>
    %cst_21 = arith.constant dense<0.000000e+00> : vector<32x256xf32>
    %37 = tpu.matmul %36, %2, %cst_21 {dimension_numbers = #tpu.dot_dimension_numbers<[1], [0], [0], [1], [0, 0, 1, 1], [], []>} : vector<32x512xbf16>, vector<512x256xbf16>, vector<32x256xf32> -> vector<32x256xf32>
    %38 = vector.broadcast %3 : vector<1x256xf32> to vector<32x256xf32>
    %39 = arith.addf %37, %38 : vector<32x256xf32>
    %cst_22 = arith.constant 0.000000e+00 : f32
    %40 = vector.broadcast %cst_22 : f32 to vector<32x256xf32>
    %41 = arith.maximumf %39, %40 : vector<32x256xf32>
    %42 = arith.truncf %41 : vector<32x256xf32> to vector<32x256xbf16>
    %cst_23 = arith.constant dense<0.000000e+00> : vector<32x8xf32>
    %43 = tpu.matmul %42, %4, %cst_23 {dimension_numbers = #tpu.dot_dimension_numbers<[1], [0], [0], [1], [0, 0, 1, 1], [], []>} : vector<32x256xbf16>, vector<256x8xbf16>, vector<32x8xf32> -> vector<32x8xf32>
    %44 = vector.broadcast %5 : vector<1x1xf32> to vector<32x8xf32>
    %45 = arith.addf %43, %44 : vector<32x8xf32>
    %46 = arith.index_cast %28 : i32 to index
    %c0_24 = arith.constant 0 : index
    %47 = vector.load %arg8[%46, %c0_24] : memref<64x8xf32, #tpu.memory_space<vmem>>, vector<32x8xf32>
    tpu.vector_store %arg8[%46, %c0_24], %45 {strides = array<i32>} : memref<64x8xf32, #tpu.memory_space<vmem>>, vector<32x8xf32>,
    %c2_i32 = arith.constant 2 : i32
    return
  }
  func.func @transform_0(%arg0: i32) -> (i32, i32) {
    %c0_i32 = arith.constant 0 : i32
    %c0_i32_0 = arith.constant 0 : i32
    return %arg0, %c0_i32 : i32, i32
  }
  func.func @transform_1(%arg0: i32) -> (i32, i32) {
    %c0_i32 = arith.constant 0 : i32
    %c0_i32_0 = arith.constant 0 : i32
    %c0_i32_1 = arith.constant 0 : i32
    return %c0_i32, %c0_i32_0 : i32, i32
  }
  func.func @transform_2(%arg0: i32) -> (i32, i32) {
    %c0_i32 = arith.constant 0 : i32
    %c0_i32_0 = arith.constant 0 : i32
    %c0_i32_1 = arith.constant 0 : i32
    return %c0_i32, %c0_i32_0 : i32, i32
  }
  func.func @transform_3(%arg0: i32) -> (i32, i32) {
    %c0_i32 = arith.constant 0 : i32
    %c0_i32_0 = arith.constant 0 : i32
    %c0_i32_1 = arith.constant 0 : i32
    return %c0_i32, %c0_i32_0 : i32, i32
  }
  func.func @transform_4(%arg0: i32) -> (i32, i32) {
    %c0_i32 = arith.constant 0 : i32
    %c0_i32_0 = arith.constant 0 : i32
    %c0_i32_1 = arith.constant 0 : i32
    return %c0_i32, %c0_i32_0 : i32, i32
  }
  func.func @transform_5(%arg0: i32) -> (i32, i32) {
    %c0_i32 = arith.constant 0 : i32
    %c0_i32_0 = arith.constant 0 : i32
    %c0_i32_1 = arith.constant 0 : i32
    return %c0_i32, %c0_i32_0 : i32, i32
  }
  func.func @transform_6(%arg0: i32) -> (i32, i32) {
    %c0_i32 = arith.constant 0 : i32
    %c0_i32_0 = arith.constant 0 : i32
    %c0_i32_1 = arith.constant 0 : i32
    return %c0_i32, %c0_i32_0 : i32, i32
  }
  func.func @transform_7(%arg0: i32) -> (i32, i32) {
    %c0_i32 = arith.constant 0 : i32
    %c0_i32_0 = arith.constant 0 : i32
    return %arg0, %c0_i32 : i32, i32
  }
}

</mosaic_0001>

<llo_original>
// kernel: tpu_custom_call.1
$region0: #{tpu_custom_call.1}
  #allocation0 [shape = 'u32[]', space=smem, size = 0x4, offset = 0x4, fixed_abs, tag = 'smem constant byte address 0x4 - core index']
  #allocation1 [shape = 'u32[144,128]{1,0:T(1,128)}', space=vmem, size = 0x12000, scoped, tag = 'internal scratch']
  #allocation2 [shape = 'f32[1,1]{1,0:T(1,128)S(1)}', space=vmem, size = 0x200, scoped, tag = 'scoped memory for tpu_custom_call.1']
  %s0 = inlined_call_operand.vmem [shape: bf16[128,128], index: 0, kind: input, shape index: {}]
  %s1 = inlined_call_operand.hbm [shape: bf16[128,512], index: 1, kind: input, shape index: {}]
  %s2 = inlined_call_operand.vmem [shape: f32[1,512], index: 2, kind: input, shape index: {}]
  %s3 = inlined_call_operand.hbm [shape: bf16[512,256], index: 3, kind: input, shape index: {}]
  %s4 = inlined_call_operand.vmem [shape: f32[1,256], index: 4, kind: input, shape index: {}]
  %s5 = inlined_call_operand.vmem [shape: bf16[256,8], index: 5, kind: input, shape index: {}]
  %s6 = inlined_call_operand.<no memory space> [shape: f32[1,1], index: 6, kind: input, shape index: {}]
  %s7 = inlined_call_operand.vmem [shape: f32[128,8], index: 7, kind: output, shape index: {}]
  %s8 = sld [smem:[#allocation0]]
  $region69: #{tpu_custom_call.1} parent=0
    _
  %s10 = ssub.s32 1, %s8
  %s11 = scalar_select 0, %s10, %s8
  %v12 = vstv %s6
  %13 = vst [vmem:[#allocation2] sm:$0x1] %v12
  $region1: #{tpu_custom_call.1} parent=0
    #allocation3 [shape = 'u8[131072]{0}', space=vmem, size = 0x20000, scoped, tag = 'input window, operand 1, single buffered']
    #allocation4 [shape = 's32[2]{0}', space=sflag, size = 0x8, scoped, tag = 'scoped memory for tpu_custom_call.1']
    #allocation5 [shape = 'u8[262144]{0}', space=vmem, size = 0x40000, scoped, tag = 'input window, operand 3, single buffered']
    #allocation6 [shape = 's32[1]{0}', space=sflag, size = 0x4, scoped, tag = 'scoped memory for tpu_custom_call.1']
    %14 = vsyncpa [#allocation4], 0
    %15 = vsyncpa [#allocation6], 0
    loop: start=0, step=1, limit=4
    $region2: #{tpu_custom_call.1} parent=1 // loop_pre_header
      _
    $region3: #{tpu_custom_call.1} parent=1 // loop_header
      %s17 = sphi 0, %s21
      %p18 = scmp.ge.s32.totalorder %s17, 4
      %s27 = sphi 0, %s29
      %s30 = sphi 0, %s27
      %s31 = sphi 0, %s30
      %s47 = sphi 0, %s31
      %s51 = sphi 0, %s51
      %s53 = sphi 0, %s51
      %s54 = sphi 0, %s53
      %s68 = sphi 0, %s54
      %s72 = sphi 0, %s72
      %s74 = sphi 0, %s72
      %s75 = sphi 0, %s74
      %s89 = sphi 0, %s75
      %s93 = sphi 0, %s93
      %s95 = sphi 0, %s93
      %s96 = sphi 0, %s95
      %s110 = sphi 0, %s96
      %s114 = sphi 0, %s114
      %s116 = sphi 0, %s114
      %s117 = sphi 0, %s116
      %s131 = sphi 0, %s117
      %s135 = sphi 0, %s135
      %s137 = sphi 0, %s135
      %s138 = sphi 0, %s137
      %s152 = sphi 0, %s138
      %s156 = sphi 0, %s156
      %s158 = sphi 0, %s156
      %s159 = sphi 0, %s158
      %s173 = sphi 0, %s159
      %s179 = sphi 0, %s181
      %s182 = sphi 0, %s179
      %s183 = sphi 0, %s182
      %s199 = sphi 0, %s183
    $region4: #{tpu_custom_call.1} parent=1 // loop_header_branch
      %20 = sbr.rel (%p18) target = $region8
    $region5: #{tpu_custom_call.1} parent=1 // loop_body
      %s22 = ssub.s32 %s17, 1
      %s23 = ssub.s32 %s17, 2
      %s24 = sadd.s32 %s17, 1
      %s25 = ssub.s32 %s17, %s24
      %p26 = scmp.eq.s32.totalorder %s25, 0
      %s28 = sadd.s32 %s27, 1
      %s29 = scalar_select %p26, %s27, %s28
      %p32 = pneg %p26
      %p33 = scmp.eq.s32.totalorder %s17, 1
      %p34 = por %p32, %p33
      %p35 = scmp.ne.s32.totalorder %s27, %s30
      %p36 = scmp.eq.s32.totalorder %s17, 0
      %p37 = por %p35, %p36
      %p38 = scmp.ne.s32.totalorder %s27, %s30
      %p39 = scmp.eq.s32.totalorder %s22, 1
      %p40 = por %p38, %p39
      %p41 = scmp.ne.s32.totalorder %s30, %s31
      %p42 = scmp.eq.s32.totalorder %s22, 0
      %p43 = por %p41, %p42
      %p44 = scmp.ne.s32.totalorder %s30, %s31
      %p45 = scmp.eq.s32.totalorder %s23, 1
      %p46 = por %p44, %p45
      %p48 = scmp.ne.s32.totalorder %s31, %s47
      %p49 = scmp.eq.s32.totalorder %s23, 0
      %p50 = por %p48, %p49
      %s52 = sadd.s32 %s51, 1
      %p55 = scmp.eq.s32.totalorder %s17, 1
      %p56 = scmp.ne.s32.totalorder %s51, %s53
      %p57 = scmp.eq.s32.totalorder %s17, 0
      %p58 = por %p56, %p57
      %p59 = scmp.ne.s32.totalorder %s51, %s53
      %p60 = scmp.eq.s32.totalorder %s22, 1
      %p61 = por %p59, %p60
      %p62 = scmp.ne.s32.totalorder %s53, %s54
      %p63 = scmp.eq.s32.totalorder %s22, 0
      %p64 = por %p62, %p63
      %p65 = scmp.ne.s32.totalorder %s53, %s54
      %p66 = scmp.eq.s32.totalorder %s23, 1
      %p67 = por %p65, %p66
      %p69 = scmp.ne.s32.totalorder %s54, %s68
      %p70 = scmp.eq.s32.totalorder %s23, 0
      %p71 = por %p69, %p70
      %s73 = sadd.s32 %s72, 1
      %p76 = scmp.eq.s32.totalorder %s17, 1
      %p77 = scmp.ne.s32.totalorder %s72, %s74
      %p78 = scmp.eq.s32.totalorder %s17, 0
      %p79 = por %p77, %p78
      %p80 = scmp.ne.s32.totalorder %s72, %s74
      %p81 = scmp.eq.s32.totalorder %s22, 1
      %p82 = por %p80, %p81
      %p83 = scmp.ne.s32.totalorder %s74, %s75
      %p84 = scmp.eq.s32.totalorder %s22, 0
      %p85 = por %p83, %p84
      %p86 = scmp.ne.s32.totalorder %s74, %s75
      %p87 = scmp.eq.s32.totalorder %s23, 1
      %p88 = por %p86, %p87
      %p90 = scmp.ne.s32.totalorder %s75, %s89
      %p91 = scmp.eq.s32.totalorder %s23, 0
      %p92 = por %p90, %p91
      %s94 = sadd.s32 %s93, 1
      %p97 = scmp.eq.s32.totalorder %s17, 1
      %p98 = scmp.ne.s32.totalorder %s93, %s95
      %p99 = scmp.eq.s32.totalorder %s17, 0
      %p100 = por %p98, %p99
      %p101 = scmp.ne.s32.totalorder %s93, %s95
      %p102 = scmp.eq.s32.totalorder %s22, 1
      %p103 = por %p101, %p102
      %p104 = scmp.ne.s32.totalorder %s95, %s96
      %p105 = scmp.eq.s32.totalorder %s22, 0
      %p106 = por %p104, %p105
      %p107 = scmp.ne.s32.totalorder %s95, %s96
      %p108 = scmp.eq.s32.totalorder %s23, 1
      %p109 = por %p107, %p108
      %p111 = scmp.ne.s32.totalorder %s96, %s110
      %p112 = scmp.eq.s32.totalorder %s23, 0
      %p113 = por %p111, %p112
      %s115 = sadd.s32 %s114, 1
      %p118 = scmp.eq.s32.totalorder %s17, 1
      %p119 = scmp.ne.s32.totalorder %s114, %s116
      %p120 = scmp.eq.s32.totalorder %s17, 0
      %p121 = por %p119, %p120
      %p122 = scmp.ne.s32.totalorder %s114, %s116
      %p123 = scmp.eq.s32.totalorder %s22, 1
      %p124 = por %p122, %p123
      %p125 = scmp.ne.s32.totalorder %s116, %s117
      %p126 = scmp.eq.s32.totalorder %s22, 0
      %p127 = por %p125, %p126
      %p128 = scmp.ne.s32.totalorder %s116, %s117
      %p129 = scmp.eq.s32.totalorder %s23, 1
      %p130 = por %p128, %p129
      %p132 = scmp.ne.s32.totalorder %s117, %s131
      %p133 = scmp.eq.s32.totalorder %s23, 0
      %p134 = por %p132, %p133
      %s136 = sadd.s32 %s135, 1
      %p139 = scmp.eq.s32.totalorder %s17, 1
      %p140 = scmp.ne.s32.totalorder %s135, %s137
      %p141 = scmp.eq.s32.totalorder %s17, 0
      %p142 = por %p140, %p141
      %p143 = scmp.ne.s32.totalorder %s135, %s137
      %p144 = scmp.eq.s32.totalorder %s22, 1
      %p145 = por %p143, %p144
      %p146 = scmp.ne.s32.totalorder %s137, %s138
      %p147 = scmp.eq.s32.totalorder %s22, 0
      %p148 = por %p146, %p147
      %p149 = scmp.ne.s32.totalorder %s137, %s138
      %p150 = scmp.eq.s32.totalorder %s23, 1
      %p151 = por %p149, %p150
      %p153 = scmp.ne.s32.totalorder %s138, %s152
      %p154 = scmp.eq.s32.totalorder %s23, 0
      %p155 = por %p153, %p154
      %s157 = sadd.s32 %s156, 1
      %p160 = scmp.eq.s32.totalorder %s17, 1
      %p161 = scmp.ne.s32.totalorder %s156, %s158
      %p162 = scmp.eq.s32.totalorder %s17, 0
      %p163 = por %p161, %p162
      %p164 = scmp.ne.s32.totalorder %s156, %s158
      %p165 = scmp.eq.s32.totalorder %s22, 1
      %p166 = por %p164, %p165
      %p167 = scmp.ne.s32.totalorder %s158, %s159
      %p168 = scmp.eq.s32.totalorder %s22, 0
      %p169 = por %p167, %p168
      %p170 = scmp.ne.s32.totalorder %s158, %s159
      %p171 = scmp.eq.s32.totalorder %s23, 1
      %p172 = por %p170, %p171
      %p174 = scmp.ne.s32.totalorder %s159, %s173
      %p175 = scmp.eq.s32.totalorder %s23, 0
      %p176 = por %p174, %p175
      %s177 = ssub.s32 %s17, %s24
      %p178 = scmp.eq.s32.totalorder %s177, 0
      %s180 = sadd.s32 %s179, 1
      %s181 = scalar_select %p178, %s179, %s180
      %p184 = pneg %p178
      %p185 = scmp.eq.s32.totalorder %s17, 1
      %p186 = por %p184, %p185
      %p187 = scmp.ne.s32.totalorder %s179, %s182
      %p188 = scmp.eq.s32.totalorder %s17, 0
      %p189 = por %p187, %p188
      %p190 = scmp.ne.s32.totalorder %s179, %s182
      %p191 = scmp.eq.s32.totalorder %s22, 1
      %p192 = por %p190, %p191
      %p193 = scmp.ne.s32.totalorder %s182, %s183
      %p194 = scmp.eq.s32.totalorder %s22, 0
      %p195 = por %p193, %p194
      %p196 = scmp.ne.s32.totalorder %s182, %s183
      %p197 = scmp.eq.s32.totalorder %s23, 1
      %p198 = por %p196, %p197
      %p200 = scmp.ne.s32.totalorder %s183, %s199
      %p201 = scmp.eq.s32.totalorder %s23, 0
      %p202 = por %p200, %p201
      %p203 = scmp.le.s32.totalorder 1, %s17
      %p204 = scmp.lt.s32.totalorder %s17, 3
      %p205 = pnand %p203, %p204
      %p206 = pneg %p205
      // Predicated region
      $region9: #{tpu_custom_call.1} parent=5 // pred_check
        _
      $region10: #{tpu_custom_call.1} parent=5 // pred_check_branch
        %208 = sbr.rel (%p205) target = $region12
      $region11: #{tpu_custom_call.1} parent=5 // pred_region
        %s209 = ssub.s32 %s17, 1
        // Predicated region
        $region13: #{tpu_custom_call.1} parent=11 // pred_check
          %p210 = pneg %p64
        $region14: #{tpu_custom_call.1} parent=11 // pred_check_branch
          %212 = sbr.rel (%p210) target = $region16
        $region15: #{tpu_custom_call.1} parent=11 // pred_region
          %s214 = ssub.s32 4096, 4096
          %215 = vsyncadd [#allocation4], %s214
          %s216 = sshll.u32 [#allocation3], 4
          %s217 = int_to_ptr.vmem [resolvable:$true] %s216
          %222 = dma.hbm_to_vmem [thread:$0]  %s1, 4096, %s217, [#allocation4], 256, 256, 16
        $region16: #{tpu_custom_call.1} parent=11 // pred_fallthru
          _
        // Predicated region
        $region17: #{tpu_custom_call.1} parent=11 // pred_check
          %p223 = pneg %p85
        $region18: #{tpu_custom_call.1} parent=11 // pred_check_branch
          %225 = sbr.rel (%p223) target = $region20
        $region19: #{tpu_custom_call.1} parent=11 // pred_region
          _
        $region20: #{tpu_custom_call.1} parent=11 // pred_fallthru
          _
        // Predicated region
        $region21: #{tpu_custom_call.1} parent=11 // pred_check
          %p226 = pneg %p106
        $region22: #{tpu_custom_call.1} parent=11 // pred_check_branch
          %228 = sbr.rel (%p226) target = $region24
        $region23: #{tpu_custom_call.1} parent=11 // pred_region
          %s230 = ssub.s32 8192, 8192
          %231 = vsyncadd [#allocation6], %s230
          %s232 = sshll.u32 [#allocation5], 4
          %s233 = int_to_ptr.vmem [resolvable:$true] %s232
          %238 = dma.hbm_to_vmem [thread:$0]  %s3, 8192, %s233, [#allocation6], 128, 128, 8
        $region24: #{tpu_custom_call.1} parent=11 // pred_fallthru
          _
        // Predicated region
        $region25: #{tpu_custom_call.1} parent=11 // pred_check
          %p239 = pneg %p127
        $region26: #{tpu_custom_call.1} parent=11 // pred_check_branch
          %241 = sbr.rel (%p239) target = $region28
        $region27: #{tpu_custom_call.1} parent=11 // pred_region
          _
        $region28: #{tpu_custom_call.1} parent=11 // pred_fallthru
          _
        // Predicated region
        $region29: #{tpu_custom_call.1} parent=11 // pred_check
          %p242 = pneg %p148
        $region30: #{tpu_custom_call.1} parent=11 // pred_check_branch
          %244 = sbr.rel (%p242) target = $region32
        $region31: #{tpu_custom_call.1} parent=11 // pred_region
          _
        $region32: #{tpu_custom_call.1} parent=11 // pred_fallthru
          _
        // Predicated region
        $region33: #{tpu_custom_call.1} parent=11 // pred_check
          %p245 = pneg %p169
        $region34: #{tpu_custom_call.1} parent=11 // pred_check_branch
          %247 = sbr.rel (%p245) target = $region36
        $region35: #{tpu_custom_call.1} parent=11 // pred_region
          _
        $region36: #{tpu_custom_call.1} parent=11 // pred_fallthru
          _
      $region12: #{tpu_custom_call.1} parent=5 // pred_fallthru
        _
      %p248 = scmp.lt.s32.totalorder %s17, 2
      // Predicated region
      $region37: #{tpu_custom_call.1} parent=5 // pred_check
        %p249 = pneg %p248
      $region38: #{tpu_custom_call.1} parent=5 // pred_check_branch
        %251 = sbr.rel (%p249) target = $region40
      $region39: #{tpu_custom_call.1} parent=5 // pred_region
        // Predicated region
        $region41: #{tpu_custom_call.1} parent=39 // pred_check
          %p252 = pneg %p37
        $region42: #{tpu_custom_call.1} parent=39 // pred_check_branch
          %254 = sbr.rel (%p252) target = $region44
        $region43: #{tpu_custom_call.1} parent=39 // pred_region
          %s255 = smul.u32 8, %s17
          %p256 = scmp.lt.s32.totalorder %s255, 15
          %s257 = scalar_select %p256, %s255, 15
          %s258 = smul.addr %s257, 4
          %s259 = scalar_lea.vmem %s0, %s258
          %s260 = smul.u32 8, %s17
        $region44: #{tpu_custom_call.1} parent=39 // pred_fallthru
          _
      $region40: #{tpu_custom_call.1} parent=5 // pred_fallthru
        _
      %p261 = scmp.le.s32.totalorder 1, %s17
      %p262 = scmp.lt.s32.totalorder %s17, 3
      %p263 = pnand %p261, %p262
      %p264 = pneg %p263
      // Predicated region
      $region45: #{tpu_custom_call.1} parent=5 // pred_check
        _
      $region46: #{tpu_custom_call.1} parent=5 // pred_check_branch
        %266 = sbr.rel (%p263) target = $region48
      $region47: #{tpu_custom_call.1} parent=5 // pred_region
        %s267 = ssub.s32 %s17, 1
        // Predicated region
        $region49: #{tpu_custom_call.1} parent=47 // pred_check
          %p268 = pneg %p64
        $region50: #{tpu_custom_call.1} parent=47 // pred_check_branch
          %270 = sbr.rel (%p268) target = $region52
        $region51: #{tpu_custom_call.1} parent=47 // pred_region
          %271 = dma.done [#allocation4], 4096
        $region52: #{tpu_custom_call.1} parent=47 // pred_fallthru
          _
        // Predicated region
        $region53: #{tpu_custom_call.1} parent=47 // pred_check
          %p272 = pneg %p106
        $region54: #{tpu_custom_call.1} parent=47 // pred_check_branch
          %274 = sbr.rel (%p272) target = $region56
        $region55: #{tpu_custom_call.1} parent=47 // pred_region
          %275 = dma.done [#allocation6], 8192
        $region56: #{tpu_custom_call.1} parent=47 // pred_fallthru
          _
        %s276 = smul.u32 8, %s22
        %p277 = scmp.lt.s32.totalorder %s276, 15
        %s278 = scalar_select %p277, %s276, 15
        %s279 = smul.addr %s278, 4
        %s280 = scalar_lea.vmem %s0, %s279
        %p281 = pneg %p43
        %p282 = pneg %p40
        %p283 = pneg %p64
        %p284 = pneg %p61
        %p285 = pneg %p85
        %p286 = pneg %p82
        %p287 = pneg %p106
        %p288 = pneg %p103
        %p289 = pneg %p127
        %p290 = pneg %p124
        %p291 = pneg %p148
        %p292 = pneg %p145
        %p293 = pneg %p169
        %p294 = pneg %p166
        %p295 = pneg %p195
        %p296 = pneg %p192
        %s297 = smul.u32 8, %s22
        %p298 = scmp.lt.s32.totalorder %s297, 15
        %s299 = scalar_select %p298, %s297, 15
        %s300 = smul.addr %s299, 8
        %s301 = scalar_lea.vmem %s7, %s300
        %s302 = smul.u32 8, %s22
        %p303 = scmp.lt.s32.totalorder %s302, 15
        %s304 = scalar_select %p303, %s302, 15
        %s305 = smul.addr %s304, 4
        %s306 = scalar_lea.vmem %s0, %s305
        %s307 = smul.u32 8, %s22
        %s308 = smul.u32 8, %s22
        %p309 = scmp.lt.s32.totalorder %s308, 15
        %s310 = scalar_select %p309, %s308, 15
        %s311 = smul.addr %s310, 8
        %s312 = scalar_lea.vmem %s7, %s311
        %s313 = smul.u32 8, %s22
        %v315 = vld [vmem:[#allocation3] sm:$0xff]
        %v316 = vld [vmem:[#allocation3 + $0x8] sm:$0xff]
        %v317 = vld [vmem:[#allocation3 + $0x10] sm:$0xff]
        %v318 = vld [vmem:[#allocation3 + $0x18] sm:$0xff]
        %v319 = vld [vmem:[#allocation3 + $0x20] sm:$0xff]
        %v320 = vld [vmem:[#allocation3 + $0x28] sm:$0xff]
        %v321 = vld [vmem:[#allocation3 + $0x30] sm:$0xff]
        %v322 = vld [vmem:[#allocation3 + $0x38] sm:$0xff]
        %v323 = vld [vmem:[#allocation3 + $0x40] sm:$0xff]
        %v324 = vld [vmem:[#allocation3 + $0x48] sm:$0xff]
        %v325 = vld [vmem:[#allocation3 + $0x50] sm:$0xff]
        %v326 = vld [vmem:[#allocation3 + $0x58] sm:$0xff]
        %v327 = vld [vmem:[#allocation3 + $0x60] sm:$0xff]
        %v328 = vld [vmem:[#allocation3 + $0x68] sm:$0xff]
        %v329 = vld [vmem:[#allocation3 + $0x70] sm:$0xff]
        %v330 = vld [vmem:[#allocation3 + $0x78] sm:$0xff]
        %v331 = vld [vmem:[#allocation3 + $0x80] sm:$0xff]
        %v332 = vld [vmem:[#allocation3 + $0x88] sm:$0xff]
        %v333 = vld [vmem:[#allocation3 + $0x90] sm:$0xff]
        %v334 = vld [vmem:[#allocation3 + $0x98] sm:$0xff]
        %v335 = vld [vmem:[#allocation3 + $0xa0] sm:$0xff]
        %v336 = vld [vmem:[#allocation3 + $0xa8] sm:$0xff]
        %v337 = vld [vmem:[#allocation3 + $0xb0] sm:$0xff]
        %v338 = vld [vmem:[#allocation3 + $0xb8] sm:$0xff]
        %v339 = vld [vmem:[#allocation3 + $0xc0] sm:$0xff]
        %v340 = vld [vmem:[#allocation3 + $0xc8] sm:$0xff]
        %v341 = vld [vmem:[#allocation3 + $0xd0] sm:$0xff]
        %v342 = vld [vmem:[#allocation3 + $0xd8] sm:$0xff]
        %v343 = vld [vmem:[#allocation3 + $0xe0] sm:$0xff]
        %v344 = vld [vmem:[#allocation3 + $0xe8] sm:$0xff]
        %v345 = vld [vmem:[#allocation3 + $0xf0] sm:$0xff]
        %v346 = vld [vmem:[#allocation3 + $0xf8] sm:$0xff]
        %v347 = vld [vmem:[%s2] sm:$0xf]
        %v348 = vld [vmem:[#allocation5] sm:$0xff]
        %v349 = vld [vmem:[#allocation5 + $0x8] sm:$0xff]
        %v350 = vld [vmem:[#allocation5 + $0x10] sm:$0xff]
        %v351 = vld [vmem:[#allocation5 + $0x18] sm:$0xff]
        %v352 = vld [vmem:[#allocation5 + $0x20] sm:$0xff]
        %v353 = vld [vmem:[#allocation5 + $0x28] sm:$0xff]
        %v354 = vld [vmem:[#allocation5 + $0x30] sm:$0xff]
        %v355 = vld [vmem:[#allocation5 + $0x38] sm:$0xff]
        %v356 = vld [vmem:[#allocation5 + $0x40] sm:$0xff]
        %v357 = vld [vmem:[#allocation5 + $0x48] sm:$0xff]
        %v358 = vld [vmem:[#allocation5 + $0x50] sm:$0xff]
        %v359 = vld [vmem:[#allocation5 + $0x58] sm:$0xff]
        %v360 = vld [vmem:[#allocation5 + $0x60] sm:$0xff]
        %v361 = vld [vmem:[#allocation5 + $0x68] sm:$0xff]
        %v362 = vld [vmem:[#allocation5 + $0x70] sm:$0xff]
        %v363 = vld [vmem:[#allocation5 + $0x78] sm:$0xff]
        %v364 = vld [vmem:[#allocation5 + $0x80] sm:$0xff]
        %v365 = vld [vmem:[#allocation5 + $0x88] sm:$0xff]
        %v366 = vld [vmem:[#allocation5 + $0x90] sm:$0xff]
        %v367 = vld [vmem:[#allocation5 + $0x98] sm:$0xff]
        %v368 = vld [vmem:[#allocation5 + $0xa0] sm:$0xff]
        %v369 = vld [vmem:[#allocation5 + $0xa8] sm:$0xff]
        %v370 = vld [vmem:[#allocation5 + $0xb0] sm:$0xff]
        %v371 = vld [vmem:[#allocation5 + $0xb8] sm:$0xff]
        %v372 = vld [vmem:[#allocation5 + $0xc0] sm:$0xff]
        %v373 = vld [vmem:[#allocation5 + $0xc8] sm:$0xff]
        %v374 = vld [vmem:[#allocation5 + $0xd0] sm:$0xff]
        %v375 = vld [vmem:[#allocation5 + $0xd8] sm:$0xff]
        %v376 = vld [vmem:[#allocation5 + $0xe0] sm:$0xff]
        %v377 = vld [vmem:[#allocation5 + $0xe8] sm:$0xff]
        %v378 = vld [vmem:[#allocation5 + $0xf0] sm:$0xff]
        %v379 = vld [vmem:[#allocation5 + $0xf8] sm:$0xff]
        %v380 = vld [vmem:[#allocation5 + $0x100] sm:$0xff]
        %v381 = vld [vmem:[#allocation5 + $0x108] sm:$0xff]
        %v382 = vld [vmem:[#allocation5 + $0x110] sm:$0xff]
        %v383 = vld [vmem:[#allocation5 + $0x118] sm:$0xff]
        %v384 = vld [vmem:[#allocation5 + $0x120] sm:$0xff]
        %v385 = vld [vmem:[#allocation5 + $0x128] sm:$0xff]
        %v386 = vld [vmem:[#allocation5 + $0x130] sm:$0xff]
        %v387 = vld [vmem:[#allocation5 + $0x138] sm:$0xff]
        %v388 = vld [vmem:[#allocation5 + $0x140] sm:$0xff]
        %v389 = vld [vmem:[#allocation5 + $0x148] sm:$0xff]
        %v390 = vld [vmem:[#allocation5 + $0x150] sm:$0xff]
        %v391 = vld [vmem:[#allocation5 + $0x158] sm:$0xff]
        %v392 = vld [vmem:[#allocation5 + $0x160] sm:$0xff]
        %v393 = vld [vmem:[#allocation5 + $0x168] sm:$0xff]
        %v394 = vld [vmem:[#allocation5 + $0x170] sm:$0xff]
        %v395 = vld [vmem:[#allocation5 + $0x178] sm:$0xff]
        %v396 = vld [vmem:[#allocation5 + $0x180] sm:$0xff]
        %v397 = vld [vmem:[#allocation5 + $0x188] sm:$0xff]
        %v398 = vld [vmem:[#allocation5 + $0x190] sm:$0xff]
        %v399 = vld [vmem:[#allocation5 + $0x198] sm:$0xff]
        %v400 = vld [vmem:[#allocation5 + $0x1a0] sm:$0xff]
        %v401 = vld [vmem:[#allocation5 + $0x1a8] sm:$0xff]
        %v402 = vld [vmem:[#allocation5 + $0x1b0] sm:$0xff]
        %v403 = vld [vmem:[#allocation5 + $0x1b8] sm:$0xff]
        %v404 = vld [vmem:[#allocation5 + $0x1c0] sm:$0xff]
        %v405 = vld [vmem:[#allocation5 + $0x1c8] sm:$0xff]
        %v406 = vld [vmem:[#allocation5 + $0x1d0] sm:$0xff]
        %v407 = vld [vmem:[#allocation5 + $0x1d8] sm:$0xff]
        %v408 = vld [vmem:[#allocation5 + $0x1e0] sm:$0xff]
        %v409 = vld [vmem:[#allocation5 + $0x1e8] sm:$0xff]
        %v410 = vld [vmem:[#allocation5 + $0x1f0] sm:$0xff]
        %v411 = vld [vmem:[#allocation5 + $0x1f8] sm:$0xff]
        %v412 = vld [vmem:[%s4] sm:$0x3]
        %v413 = vld [vmem:[%s5] sm:$0xf]
        %v414 = vld [vmem:[%s5 + $0x4] sm:$0xf]
        %v415 = vld [vmem:[%s5 + $0x8] sm:$0xf]
        %v416 = vld [vmem:[%s5 + $0xc] sm:$0xf]
        %v417 = vld [vmem:[%s5 + $0x10] sm:$0xf]
        %v418 = vld [vmem:[%s5 + $0x14] sm:$0xf]
        %v419 = vld [vmem:[%s5 + $0x18] sm:$0xf]
        %v420 = vld [vmem:[%s5 + $0x1c] sm:$0xf]
        %v421 = vld [vmem:[%s5 + $0x20] sm:$0xf]
        %v422 = vld [vmem:[%s5 + $0x24] sm:$0xf]
        %v423 = vld [vmem:[%s5 + $0x28] sm:$0xf]
        %v424 = vld [vmem:[%s5 + $0x2c] sm:$0xf]
        %v425 = vld [vmem:[%s5 + $0x30] sm:$0xf]
        %v426 = vld [vmem:[%s5 + $0x34] sm:$0xf]
        %v427 = vld [vmem:[%s5 + $0x38] sm:$0xf]
        %v428 = vld [vmem:[%s5 + $0x3c] sm:$0xf]
        %v429 = vld [vmem:[%s5 + $0x40] sm:$0xf]
        %v430 = vld [vmem:[%s5 + $0x44] sm:$0xf]
        %v431 = vld [vmem:[%s5 + $0x48] sm:$0xf]
        %v432 = vld [vmem:[%s5 + $0x4c] sm:$0xf]
        %v433 = vld [vmem:[%s5 + $0x50] sm:$0xf]
        %v434 = vld [vmem:[%s5 + $0x54] sm:$0xf]
        %v435 = vld [vmem:[%s5 + $0x58] sm:$0xf]
        %v436 = vld [vmem:[%s5 + $0x5c] sm:$0xf]
        %v437 = vld [vmem:[%s5 + $0x60] sm:$0xf]
        %v438 = vld [vmem:[%s5 + $0x64] sm:$0xf]
        %v439 = vld [vmem:[%s5 + $0x68] sm:$0xf]
        %v440 = vld [vmem:[%s5 + $0x6c] sm:$0xf]
        %v441 = vld [vmem:[%s5 + $0x70] sm:$0xf]
        %v442 = vld [vmem:[%s5 + $0x74] sm:$0xf]
        %v443 = vld [vmem:[%s5 + $0x78] sm:$0xf]
        %v444 = vld [vmem:[%s5 + $0x7c] sm:$0xf]
        %v445 = vld [vmem:[#allocation2] sm:$0x1]
        %v446 = vld [vmem:[%s306] sm:$0xf]
        %v447 = vld [vmem:[%s306 + $0x4] sm:$0xf]
        %v448 = vld [vmem:[%s306 + $0x8] sm:$0xf]
        %v449 = vld [vmem:[%s306 + $0xc] sm:$0xf]
        %v451 = vlaneseq
        %v452 = vshrl.u32 %v451, 7
        %v453 = vsub.s32 0, %v452
        %v454 = vrot.slane %v347, %v453
        %v455 = vlaneseq
        %v456 = vshrl.u32 %v455, 7
        %v457 = vsub.s32 1, %v456
        %v458 = vrot.slane %v347, %v457
        %v459 = vlaneseq
        %v460 = vshrl.u32 %v459, 7
        %v461 = vsub.s32 2, %v460
        %v462 = vrot.slane %v347, %v461
        %v463 = vlaneseq
        %v464 = vshrl.u32 %v463, 7
        %v465 = vsub.s32 3, %v464
        %v466 = vrot.slane %v347, %v465
        %v475 = vunpack.c.l.b16 %v446
        %v476 = vunpack.c.l.b16 %v447
        %v477 = vunpack.c.l.b16 %v448
        %v478 = vunpack.c.l.b16 %v449
        %v479 = vpack.c.b16 %v476, %v475
        %v480 = vpack.c.b16 %v478, %v477
        %v515 = vunpack.c.l.b16 %v315
        %v516 = vunpack.c.h.b16 %v315
        %v517 = vunpack.c.l.b16 %v316
        %v518 = vunpack.c.h.b16 %v316
        %v519 = vunpack.c.l.b16 %v317
        %v520 = vunpack.c.h.b16 %v317
        %v521 = vunpack.c.l.b16 %v318
        %v522 = vunpack.c.h.b16 %v318
        %v523 = vunpack.c.l.b16 %v319
        %v524 = vunpack.c.h.b16 %v319
        %v525 = vunpack.c.l.b16 %v320
        %v526 = vunpack.c.h.b16 %v320
        %v527 = vunpack.c.l.b16 %v321
        %v528 = vunpack.c.h.b16 %v321
        %v529 = vunpack.c.l.b16 %v322
        %v530 = vunpack.c.h.b16 %v322
        %v531 = vunpack.c.l.b16 %v323
        %v532 = vunpack.c.h.b16 %v323
        %v533 = vunpack.c.l.b16 %v324
        %v534 = vunpack.c.h.b16 %v324
        %v535 = vunpack.c.l.b16 %v325
        %v536 = vunpack.c.h.b16 %v325
        %v537 = vunpack.c.l.b16 %v326
        %v538 = vunpack.c.h.b16 %v326
        %v539 = vunpack.c.l.b16 %v327
        %v540 = vunpack.c.h.b16 %v327
        %v541 = vunpack.c.l.b16 %v328
        %v542 = vunpack.c.h.b16 %v328
        %v543 = vunpack.c.l.b16 %v329
        %v544 = vunpack.c.h.b16 %v329
        %v545 = vunpack.c.l.b16 %v330
        %v546 = vunpack.c.h.b16 %v330
        %v547 = vunpack.c.l.b16 %v331
        %v548 = vunpack.c.h.b16 %v331
        %v549 = vunpack.c.l.b16 %v332
        %v550 = vunpack.c.h.b16 %v332
        %v551 = vunpack.c.l.b16 %v333
        %v552 = vunpack.c.h.b16 %v333
        %v553 = vunpack.c.l.b16 %v334
        %v554 = vunpack.c.h.b16 %v334
        %v555 = vunpack.c.l.b16 %v335
        %v556 = vunpack.c.h.b16 %v335
        %v557 = vunpack.c.l.b16 %v336
        %v558 = vunpack.c.h.b16 %v336
        %v559 = vunpack.c.l.b16 %v337
        %v560 = vunpack.c.h.b16 %v337
        %v561 = vunpack.c.l.b16 %v338
        %v562 = vunpack.c.h.b16 %v338
        %v563 = vunpack.c.l.b16 %v339
        %v564 = vunpack.c.h.b16 %v339
        %v565 = vunpack.c.l.b16 %v340
        %v566 = vunpack.c.h.b16 %v340
        %v567 = vunpack.c.l.b16 %v341
        %v568 = vunpack.c.h.b16 %v341
        %v569 = vunpack.c.l.b16 %v342
        %v570 = vunpack.c.h.b16 %v342
        %v571 = vunpack.c.l.b16 %v343
        %v572 = vunpack.c.h.b16 %v343
        %v573 = vunpack.c.l.b16 %v344
        %v574 = vunpack.c.h.b16 %v344
        %v575 = vunpack.c.l.b16 %v345
        %v576 = vunpack.c.h.b16 %v345
        %v577 = vunpack.c.l.b16 %v346
        %v578 = vunpack.c.h.b16 %v346
        %v579 = vpack.c.b16 %v519, %v515
        %v580 = vpack.c.b16 %v520, %v516
        %v581 = vpack.c.b16 %v521, %v517
        %v582 = vpack.c.b16 %v522, %v518
        %v583 = vpack.c.b16 %v527, %v523
        %v584 = vpack.c.b16 %v528, %v524
        %v585 = vpack.c.b16 %v529, %v525
        %v586 = vpack.c.b16 %v530, %v526
        %v587 = vpack.c.b16 %v535, %v531
        %v588 = vpack.c.b16 %v536, %v532
        %v589 = vpack.c.b16 %v537, %v533
        %v590 = vpack.c.b16 %v538, %v534
        %v591 = vpack.c.b16 %v543, %v539
        %v592 = vpack.c.b16 %v544, %v540
        %v593 = vpack.c.b16 %v545, %v541
        %v594 = vpack.c.b16 %v546, %v542
        %v595 = vpack.c.b16 %v551, %v547
        %v596 = vpack.c.b16 %v552, %v548
        %v597 = vpack.c.b16 %v553, %v549
        %v598 = vpack.c.b16 %v554, %v550
        %v599 = vpack.c.b16 %v559, %v555
        %v600 = vpack.c.b16 %v560, %v556
        %v601 = vpack.c.b16 %v561, %v557
        %v602 = vpack.c.b16 %v562, %v558
        %v603 = vpack.c.b16 %v567, %v563
        %v604 = vpack.c.b16 %v568, %v564
        %v605 = vpack.c.b16 %v569, %v565
        %v606 = vpack.c.b16 %v570, %v566
        %v607 = vpack.c.b16 %v575, %v571
        %v608 = vpack.c.b16 %v576, %v572
        %v609 = vpack.c.b16 %v577, %v573
        %v610 = vpack.c.b16 %v578, %v574
        %643 = vmatprep.subr.bf16.mxu0 %v608
        %644 = vmatpush1.bf16.msra.mxu0 %v607
        %645 = vmatprep.subr.bf16.mxu0 %v604
        %646 = vmatpush1.bf16.msra.mxu0 %v603
        %647 = vmatprep.subr.bf16.mxu0 %v600
        %648 = vmatpush1.bf16.msra.mxu0 %v599
        %649 = vmatprep.subr.bf16.mxu0 %v596
        %650 = vmatpush1.bf16.msra.mxu0 %v595
        %651 = vmatprep.subr.bf16.mxu0 %v592
        %652 = vmatpush1.bf16.msra.mxu0 %v591
        %653 = vmatprep.subr.bf16.mxu0 %v588
        %654 = vmatpush1.bf16.msra.mxu0 %v587
        %655 = vmatprep.subr.bf16.mxu0 %v584
        %656 = vmatpush1.bf16.msra.mxu0 %v583
        %657 = vmatprep.subr.bf16.mxu0 %v580
        %658 = vmatpush1.bf16.msra.mxu0 %v579
        %659 = vmatprep.subr.bf16.mxu0 0
        %660 = vmatpush2.bf16.msra.mxu0 0
        %661 = vmatprep.subr.bf16.mxu0 0
        %662 = vmatpush2.bf16.msra.mxu0 0
        %663 = vmatprep.subr.bf16.mxu0 0
        %664 = vmatpush2.bf16.msra.mxu0 0
        %665 = vmatprep.subr.bf16.mxu0 0
        %666 = vmatpush2.bf16.msra.mxu0 0
        %667 = vmatprep.subr.bf16.mxu0 0
        %668 = vmatpush2.bf16.msra.mxu0 0
        %669 = vmatprep.subr.bf16.mxu0 0
        %670 = vmatpush2.bf16.msra.mxu0 0
        %671 = vmatprep.subr.bf16.mxu0 0
        %672 = vmatpush2.bf16.msra.mxu0 0
        %673 = vmatprep.subr.bf16.mxu0 0
        %674 = vmatpush2.bf16.msra.mxu0 0
        %675 = vmatprep.mubr.bf16.mxu0 0
        %676 = vmatmul.mubr.bf16.gmra.mxu0 %v479
        %v677 = vpop.f32.mrf.mxu0
        %v678 = vadd.f32 %v454, %v677
        %v679 = vpop.f32.mrf.mxu0
        %v680 = vadd.f32 %v458, %v679
        %v681 = vpop.f32.mrf.mxu0
        %v682 = vadd.f32 %v454, %v681
        %v683 = vpop.f32.mrf.mxu0
        %v684 = vadd.f32 %v458, %v683
        %685 = vmatprep.mubr.bf16.mxu0 0
        %686 = vmatmul.mubr.bf16.gmra.mxu0 %v480
        %v687 = vpop.f32.mrf.mxu0
        %v688 = vadd.f32 %v454, %v687
        %v689 = vpop.f32.mrf.mxu0
        %v690 = vadd.f32 %v458, %v689
        %v691 = vpop.f32.mrf.mxu0
        %v692 = vadd.f32 %v454, %v691
        %v693 = vpop.f32.mrf.mxu0
        %v694 = vadd.f32 %v458, %v693
        %695 = vdwg.mxu0
        %696 = vmatprep.subr.bf16.mxu0 %v610
        %697 = vmatpush1.bf16.msra.mxu0 %v609
        %698 = vmatprep.subr.bf16.mxu0 %v606
        %699 = vmatpush1.bf16.msra.mxu0 %v605
        %700 = vmatprep.subr.bf16.mxu0 %v602
        %701 = vmatpush1.bf16.msra.mxu0 %v601
        %702 = vmatprep.subr.bf16.mxu0 %v598
        %703 = vmatpush1.bf16.msra.mxu0 %v597
        %704 = vmatprep.subr.bf16.mxu0 %v594
        %705 = vmatpush1.bf16.msra.mxu0 %v593
        %706 = vmatprep.subr.bf16.mxu0 %v590
        %707 = vmatpush1.bf16.msra.mxu0 %v589
        %708 = vmatprep.subr.bf16.mxu0 %v586
        %709 = vmatpush1.bf16.msra.mxu0 %v585
        %710 = vmatprep.subr.bf16.mxu0 %v582
        %711 = vmatpush1.bf16.msra.mxu0 %v581
        %712 = vmatprep.subr.bf16.mxu0 0
        %713 = vmatpush2.bf16.msra.mxu0 0
        %714 = vmatprep.subr.bf16.mxu0 0
        %715 = vmatpush2.bf16.msra.mxu0 0
        %716 = vmatprep.subr.bf16.mxu0 0
        %717 = vmatpush2.bf16.msra.mxu0 0
        %718 = vmatprep.subr.bf16.mxu0 0
        %719 = vmatpush2.bf16.msra.mxu0 0
        %720 = vmatprep.subr.bf16.mxu0 0
        %721 = vmatpush2.bf16.msra.mxu0 0
        %722 = vmatprep.subr.bf16.mxu0 0
        %723 = vmatpush2.bf16.msra.mxu0 0
        %724 = vmatprep.subr.bf16.mxu0 0
        %725 = vmatpush2.bf16.msra.mxu0 0
        %726 = vmatprep.subr.bf16.mxu0 0
        %727 = vmatpush2.bf16.msra.mxu0 0
        %728 = vmatprep.mubr.bf16.mxu0 0
        %729 = vmatmul.mubr.bf16.gmra.mxu0 %v479
        %v730 = vpop.f32.mrf.mxu0
        %v731 = vadd.f32 %v462, %v730
        %v732 = vpop.f32.mrf.mxu0
        %v733 = vadd.f32 %v466, %v732
        %v734 = vpop.f32.mrf.mxu0
        %v735 = vadd.f32 %v462, %v734
        %v736 = vpop.f32.mrf.mxu0
        %v737 = vadd.f32 %v466, %v736
        %738 = vmatprep.mubr.bf16.mxu0 0
        %739 = vmatmul.mubr.bf16.gmra.mxu0 %v480
        %v740 = vpop.f32.mrf.mxu0
        %v741 = vadd.f32 %v462, %v740
        %v742 = vpop.f32.mrf.mxu0
        %v743 = vadd.f32 %v466, %v742
        %v744 = vpop.f32.mrf.mxu0
        %v745 = vadd.f32 %v462, %v744
        %v746 = vpop.f32.mrf.mxu0
        %v747 = vadd.f32 %v466, %v746
        %748 = vdwg.mxu0
        %v749 = vmax.f32 %v678, 0.0
        %v750 = vmax.f32 %v680, 0.0
        %v751 = vmax.f32 %v731, 0.0
        %v752 = vmax.f32 %v733, 0.0
        %v753 = vmax.f32 %v682, 0.0
        %v754 = vmax.f32 %v684, 0.0
        %v755 = vmax.f32 %v735, 0.0
        %v756 = vmax.f32 %v737, 0.0
        %v757 = vmax.f32 %v688, 0.0
        %v758 = vmax.f32 %v690, 0.0
        %v759 = vmax.f32 %v741, 0.0
        %v760 = vmax.f32 %v743, 0.0
        %v761 = vmax.f32 %v692, 0.0
        %v762 = vmax.f32 %v694, 0.0
        %v763 = vmax.f32 %v745, 0.0
        %v764 = vmax.f32 %v747, 0.0
        %v765 = vpack.c.bf16 %v753, %v749
        %v766 = vpack.c.bf16 %v754, %v750
        %v767 = vpack.c.bf16 %v755, %v751
        %v768 = vpack.c.bf16 %v756, %v752
        %v769 = vpack.c.bf16 %v761, %v757
        %v770 = vpack.c.bf16 %v762, %v758
        %v771 = vpack.c.bf16 %v763, %v759
        %v772 = vpack.c.bf16 %v764, %v760
        %v774 = vlaneseq
        %v775 = vshrl.u32 %v774, 7
        %v776 = vsub.s32 0, %v775
        %v777 = vrot.slane %v412, %v776
        %v778 = vlaneseq
        %v779 = vshrl.u32 %v778, 7
        %v780 = vsub.s32 1, %v779
        %v781 = vrot.slane %v412, %v780
        %v848 = vunpack.c.l.b16 %v348
        %v849 = vunpack.c.h.b16 %v348
        %v850 = vunpack.c.l.b16 %v349
        %v851 = vunpack.c.h.b16 %v349
        %v852 = vunpack.c.l.b16 %v350
        %v853 = vunpack.c.h.b16 %v350
        %v854 = vunpack.c.l.b16 %v351
        %v855 = vunpack.c.h.b16 %v351
        %v856 = vunpack.c.l.b16 %v352
        %v857 = vunpack.c.h.b16 %v352
        %v858 = vunpack.c.l.b16 %v353
        %v859 = vunpack.c.h.b16 %v353
        %v860 = vunpack.c.l.b16 %v354
        %v861 = vunpack.c.h.b16 %v354
        %v862 = vunpack.c.l.b16 %v355
        %v863 = vunpack.c.h.b16 %v355
        %v864 = vunpack.c.l.b16 %v356
        %v865 = vunpack.c.h.b16 %v356
        %v866 = vunpack.c.l.b16 %v357
        %v867 = vunpack.c.h.b16 %v357
        %v868 = vunpack.c.l.b16 %v358
        %v869 = vunpack.c.h.b16 %v358
        %v870 = vunpack.c.l.b16 %v359
        %v871 = vunpack.c.h.b16 %v359
        %v872 = vunpack.c.l.b16 %v360
        %v873 = vunpack.c.h.b16 %v360
        %v874 = vunpack.c.l.b16 %v361
        %v875 = vunpack.c.h.b16 %v361
        %v876 = vunpack.c.l.b16 %v362
        %v877 = vunpack.c.h.b16 %v362
        %v878 = vunpack.c.l.b16 %v363
        %v879 = vunpack.c.h.b16 %v363
        %v880 = vunpack.c.l.b16 %v364
        %v881 = vunpack.c.h.b16 %v364
        %v882 = vunpack.c.l.b16 %v365
        %v883 = vunpack.c.h.b16 %v365
        %v884 = vunpack.c.l.b16 %v366
        %v885 = vunpack.c.h.b16 %v366
        %v886 = vunpack.c.l.b16 %v367
        %v887 = vunpack.c.h.b16 %v367
        %v888 = vunpack.c.l.b16 %v368
        %v889 = vunpack.c.h.b16 %v368
        %v890 = vunpack.c.l.b16 %v369
        %v891 = vunpack.c.h.b16 %v369
        %v892 = vunpack.c.l.b16 %v370
        %v893 = vunpack.c.h.b16 %v370
        %v894 = vunpack.c.l.b16 %v371
        %v895 = vunpack.c.h.b16 %v371
        %v896 = vunpack.c.l.b16 %v372
        %v897 = vunpack.c.h.b16 %v372
        %v898 = vunpack.c.l.b16 %v373
        %v899 = vunpack.c.h.b16 %v373
        %v900 = vunpack.c.l.b16 %v374
        %v901 = vunpack.c.h.b16 %v374
        %v902 = vunpack.c.l.b16 %v375
        %v903 = vunpack.c.h.b16 %v375
        %v904 = vunpack.c.l.b16 %v376
        %v905 = vunpack.c.h.b16 %v376
        %v906 = vunpack.c.l.b16 %v377
        %v907 = vunpack.c.h.b16 %v377
        %v908 = vunpack.c.l.b16 %v378
        %v909 = vunpack.c.h.b16 %v378
        %v910 = vunpack.c.l.b16 %v379
        %v911 = vunpack.c.h.b16 %v379
        %v912 = vunpack.c.l.b16 %v380
        %v913 = vunpack.c.h.b16 %v380
        %v914 = vunpack.c.l.b16 %v381
        %v915 = vunpack.c.h.b16 %v381
        %v916 = vunpack.c.l.b16 %v382
        %v917 = vunpack.c.h.b16 %v382
        %v918 = vunpack.c.l.b16 %v383
        %v919 = vunpack.c.h.b16 %v383
        %v920 = vunpack.c.l.b16 %v384
        %v921 = vunpack.c.h.b16 %v384
        %v922 = vunpack.c.l.b16 %v385
        %v923 = vunpack.c.h.b16 %v385
        %v924 = vunpack.c.l.b16 %v386
        %v925 = vunpack.c.h.b16 %v386
        %v926 = vunpack.c.l.b16 %v387
        %v927 = vunpack.c.h.b16 %v387
        %v928 = vunpack.c.l.b16 %v388
        %v929 = vunpack.c.h.b16 %v388
        %v930 = vunpack.c.l.b16 %v389
        %v931 = vunpack.c.h.b16 %v389
        %v932 = vunpack.c.l.b16 %v390
        %v933 = vunpack.c.h.b16 %v390
        %v934 = vunpack.c.l.b16 %v391
        %v935 = vunpack.c.h.b16 %v391
        %v936 = vunpack.c.l.b16 %v392
        %v937 = vunpack.c.h.b16 %v392
        %v938 = vunpack.c.l.b16 %v393
        %v939 = vunpack.c.h.b16 %v393
        %v940 = vunpack.c.l.b16 %v394
        %v941 = vunpack.c.h.b16 %v394
        %v942 = vunpack.c.l.b16 %v395
        %v943 = vunpack.c.h.b16 %v395
        %v944 = vunpack.c.l.b16 %v396
        %v945 = vunpack.c.h.b16 %v396
        %v946 = vunpack.c.l.b16 %v397
        %v947 = vunpack.c.h.b16 %v397
        %v948 = vunpack.c.l.b16 %v398
        %v949 = vunpack.c.h.b16 %v398
        %v950 = vunpack.c.l.b16 %v399
        %v951 = vunpack.c.h.b16 %v399
        %v952 = vunpack.c.l.b16 %v400
        %v953 = vunpack.c.h.b16 %v400
        %v954 = vunpack.c.l.b16 %v401
        %v955 = vunpack.c.h.b16 %v401
        %v956 = vunpack.c.l.b16 %v402
        %v957 = vunpack.c.h.b16 %v402
        %v958 = vunpack.c.l.b16 %v403
        %v959 = vunpack.c.h.b16 %v403
        %v960 = vunpack.c.l.b16 %v404
        %v961 = vunpack.c.h.b16 %v404
        %v962 = vunpack.c.l.b16 %v405
        %v963 = vunpack.c.h.b16 %v405
        %v964 = vunpack.c.l.b16 %v406
        %v965 = vunpack.c.h.b16 %v406
        %v966 = vunpack.c.l.b16 %v407
        %v967 = vunpack.c.h.b16 %v407
        %v968 = vunpack.c.l.b16 %v408
        %v969 = vunpack.c.h.b16 %v408
        %v970 = vunpack.c.l.b16 %v409
        %v971 = vunpack.c.h.b16 %v409
        %v972 = vunpack.c.l.b16 %v410
        %v973 = vunpack.c.h.b16 %v410
        %v974 = vunpack.c.l.b16 %v411
        %v975 = vunpack.c.h.b16 %v411
        %v976 = vpack.c.b16 %v850, %v848
        %v977 = vpack.c.b16 %v851, %v849
        %v978 = vpack.c.b16 %v854, %v852
        %v979 = vpack.c.b16 %v855, %v853
        %v980 = vpack.c.b16 %v858, %v856
        %v981 = vpack.c.b16 %v859, %v857
        %v982 = vpack.c.b16 %v862, %v860
        %v983 = vpack.c.b16 %v863, %v861
        %v984 = vpack.c.b16 %v866, %v864
        %v985 = vpack.c.b16 %v867, %v865
        %v986 = vpack.c.b16 %v870, %v868
        %v987 = vpack.c.b16 %v871, %v869
        %v988 = vpack.c.b16 %v874, %v872
        %v989 = vpack.c.b16 %v875, %v873
        %v990 = vpack.c.b16 %v878, %v876
        %v991 = vpack.c.b16 %v879, %v877
        %v992 = vpack.c.b16 %v882, %v880
        %v993 = vpack.c.b16 %v883, %v881
        %v994 = vpack.c.b16 %v886, %v884
        %v995 = vpack.c.b16 %v887, %v885
        %v996 = vpack.c.b16 %v890, %v888
        %v997 = vpack.c.b16 %v891, %v889
        %v998 = vpack.c.b16 %v894, %v892
        %v999 = vpack.c.b16 %v895, %v893
        %v1000 = vpack.c.b16 %v898, %v896
        %v1001 = vpack.c.b16 %v899, %v897
        %v1002 = vpack.c.b16 %v902, %v900
        %v1003 = vpack.c.b16 %v903, %v901
        %v1004 = vpack.c.b16 %v906, %v904
        %v1005 = vpack.c.b16 %v907, %v905
        %v1006 = vpack.c.b16 %v910, %v908
        %v1007 = vpack.c.b16 %v911, %v909
        %v1008 = vpack.c.b16 %v914, %v912
        %v1009 = vpack.c.b16 %v915, %v913
        %v1010 = vpack.c.b16 %v918, %v916
        %v1011 = vpack.c.b16 %v919, %v917
        %v1012 = vpack.c.b16 %v922, %v920
        %v1013 = vpack.c.b16 %v923, %v921
        %v1014 = vpack.c.b16 %v926, %v924
        %v1015 = vpack.c.b16 %v927, %v925
        %v1016 = vpack.c.b16 %v930, %v928
        %v1017 = vpack.c.b16 %v931, %v929
        %v1018 = vpack.c.b16 %v934, %v932
        %v1019 = vpack.c.b16 %v935, %v933
        %v1020 = vpack.c.b16 %v938, %v936
        %v1021 = vpack.c.b16 %v939, %v937
        %v1022 = vpack.c.b16 %v942, %v940
        %v1023 = vpack.c.b16 %v943, %v941
        %v1024 = vpack.c.b16 %v946, %v944
        %v1025 = vpack.c.b16 %v947, %v945
        %v1026 = vpack.c.b16 %v950, %v948
        %v1027 = vpack.c.b16 %v951, %v949
        %v1028 = vpack.c.b16 %v954, %v952
        %v1029 = vpack.c.b16 %v955, %v953
        %v1030 = vpack.c.b16 %v958, %v956
        %v1031 = vpack.c.b16 %v959, %v957
        %v1032 = vpack.c.b16 %v962, %v960
        %v1033 = vpack.c.b16 %v963, %v961
        %v1034 = vpack.c.b16 %v966, %v964
        %v1035 = vpack.c.b16 %v967, %v965
        %v1036 = vpack.c.b16 %v970, %v968
        %v1037 = vpack.c.b16 %v971, %v969
        %v1038 = vpack.c.b16 %v974, %v972
        %v1039 = vpack.c.b16 %v975, %v973
        %1104 = vmatprep.subr.bf16.mxu0 %v991
        %1105 = vmatpush1.bf16.msra.mxu0 %v990
        %1106 = vmatprep.subr.bf16.mxu0 %v989
        %1107 = vmatpush1.bf16.msra.mxu0 %v988
        %1108 = vmatprep.subr.bf16.mxu0 %v987
        %1109 = vmatpush1.bf16.msra.mxu0 %v986
        %1110 = vmatprep.subr.bf16.mxu0 %v985
        %1111 = vmatpush1.bf16.msra.mxu0 %v984
        %1112 = vmatprep.subr.bf16.mxu0 %v983
        %1113 = vmatpush1.bf16.msra.mxu0 %v982
        %1114 = vmatprep.subr.bf16.mxu0 %v981
        %1115 = vmatpush1.bf16.msra.mxu0 %v980
        %1116 = vmatprep.subr.bf16.mxu0 %v979
        %1117 = vmatpush1.bf16.msra.mxu0 %v978
        %1118 = vmatprep.subr.bf16.mxu0 %v977
        %1119 = vmatpush1.bf16.msra.mxu0 %v976
        %1120 = vmatprep.subr.bf16.mxu0 %v1007
        %1121 = vmatpush2.bf16.msra.mxu0 %v1006
        %1122 = vmatprep.subr.bf16.mxu0 %v1005
        %1123 = vmatpush2.bf16.msra.mxu0 %v1004
        %1124 = vmatprep.subr.bf16.mxu0 %v1003
        %1125 = vmatpush2.bf16.msra.mxu0 %v1002
        %1126 = vmatprep.subr.bf16.mxu0 %v1001
        %1127 = vmatpush2.bf16.msra.mxu0 %v1000
        %1128 = vmatprep.subr.bf16.mxu0 %v999
        %1129 = vmatpush2.bf16.msra.mxu0 %v998
        %1130 = vmatprep.subr.bf16.mxu0 %v997
        %1131 = vmatpush2.bf16.msra.mxu0 %v996
        %1132 = vmatprep.subr.bf16.mxu0 %v995
        %1133 = vmatpush2.bf16.msra.mxu0 %v994
        %1134 = vmatprep.subr.bf16.mxu0 %v993
        %1135 = vmatpush2.bf16.msra.mxu0 %v992
        %1136 = vmatprep.mubr.bf16.mxu0 %v766
        %1137 = vmatmul.mubr.bf16.gmra.mxu0 %v765
        %v1138 = vpop.f32.mrf.mxu0
        %v1139 = vadd.f32 %v777, %v1138
        %v1140 = vpop.f32.mrf.mxu0
        %v1141 = vadd.f32 %v781, %v1140
        %v1142 = vpop.f32.mrf.mxu0
        %v1143 = vadd.f32 %v777, %v1142
        %v1144 = vpop.f32.mrf.mxu0
        %v1145 = vadd.f32 %v781, %v1144
        %1146 = vmatprep.mubr.bf16.mxu0 %v770
        %1147 = vmatmul.mubr.bf16.gmra.mxu0 %v769
        %v1148 = vpop.f32.mrf.mxu0
        %v1149 = vadd.f32 %v777, %v1148
        %v1150 = vpop.f32.mrf.mxu0
        %v1151 = vadd.f32 %v781, %v1150
        %v1152 = vpop.f32.mrf.mxu0
        %v1153 = vadd.f32 %v777, %v1152
        %v1154 = vpop.f32.mrf.mxu0
        %v1155 = vadd.f32 %v781, %v1154
        %1156 = vdwg.mxu0
        %1157 = vmatprep.subr.bf16.mxu0 %v1023
        %1158 = vmatpush1.bf16.msra.mxu0 %v1022
        %1159 = vmatprep.subr.bf16.mxu0 %v1021
        %1160 = vmatpush1.bf16.msra.mxu0 %v1020
        %1161 = vmatprep.subr.bf16.mxu0 %v1019
        %1162 = vmatpush1.bf16.msra.mxu0 %v1018
        %1163 = vmatprep.subr.bf16.mxu0 %v1017
        %1164 = vmatpush1.bf16.msra.mxu0 %v1016
        %1165 = vmatprep.subr.bf16.mxu0 %v1015
        %1166 = vmatpush1.bf16.msra.mxu0 %v1014
        %1167 = vmatprep.subr.bf16.mxu0 %v1013
        %1168 = vmatpush1.bf16.msra.mxu0 %v1012
        %1169 = vmatprep.subr.bf16.mxu0 %v1011
        %1170 = vmatpush1.bf16.msra.mxu0 %v1010
        %1171 = vmatprep.subr.bf16.mxu0 %v1009
        %1172 = vmatpush1.bf16.msra.mxu0 %v1008
        %1173 = vmatprep.subr.bf16.mxu0 %v1039
        %1174 = vmatpush2.bf16.msra.mxu0 %v1038
        %1175 = vmatprep.subr.bf16.mxu0 %v1037
        %1176 = vmatpush2.bf16.msra.mxu0 %v1036
        %1177 = vmatprep.subr.bf16.mxu0 %v1035
        %1178 = vmatpush2.bf16.msra.mxu0 %v1034
        %1179 = vmatprep.subr.bf16.mxu0 %v1033
        %1180 = vmatpush2.bf16.msra.mxu0 %v1032
        %1181 = vmatprep.subr.bf16.mxu0 %v1031
        %1182 = vmatpush2.bf16.msra.mxu0 %v1030
        %1183 = vmatprep.subr.bf16.mxu0 %v1029
        %1184 = vmatpush2.bf16.msra.mxu0 %v1028
        %1185 = vmatprep.subr.bf16.mxu0 %v1027
        %1186 = vmatpush2.bf16.msra.mxu0 %v1026
        %1187 = vmatprep.subr.bf16.mxu0 %v1025
        %1188 = vmatpush2.bf16.msra.mxu0 %v1024
        %1189 = vmatprep.mubr.bf16.mxu0 %v768
        %1190 = vmatmul.mubr.bf16.gmra.mxu0 %v767
        %v1191 = vpop.f32.mrf.mxu0
        %v1192 = vadd.f32 %v1139, %v1191
        %v1193 = vpop.f32.mrf.mxu0
        %v1194 = vadd.f32 %v1141, %v1193
        %v1195 = vpop.f32.mrf.mxu0
        %v1196 = vadd.f32 %v1143, %v1195
        %v1197 = vpop.f32.mrf.mxu0
        %v1198 = vadd.f32 %v1145, %v1197
        %1199 = vmatprep.mubr.bf16.mxu0 %v772
        %1200 = vmatmul.mubr.bf16.gmra.mxu0 %v771
        %v1201 = vpop.f32.mrf.mxu0
        %v1202 = vadd.f32 %v1149, %v1201
        %v1203 = vpop.f32.mrf.mxu0
        %v1204 = vadd.f32 %v1151, %v1203
        %v1205 = vpop.f32.mrf.mxu0
        %v1206 = vadd.f32 %v1153, %v1205
        %v1207 = vpop.f32.mrf.mxu0
        %v1208 = vadd.f32 %v1155, %v1207
        %1209 = vdwg.mxu0
        %v1210 = vmax.f32 %v1192, 0.0
        %v1211 = vmax.f32 %v1194, 0.0
        %v1212 = vmax.f32 %v1196, 0.0
        %v1213 = vmax.f32 %v1198, 0.0
        %v1214 = vmax.f32 %v1202, 0.0
        %v1215 = vmax.f32 %v1204, 0.0
        %v1216 = vmax.f32 %v1206, 0.0
        %v1217 = vmax.f32 %v1208, 0.0
        %v1218 = vpack.c.bf16 %v1212, %v1210
        %v1219 = vpack.c.bf16 %v1213, %v1211
        %v1220 = vpack.c.bf16 %v1216, %v1214
        %v1221 = vpack.c.bf16 %v1217, %v1215
        %v1223 = vlaneseq
        %v1224 = vshrl.u32 %v1223, 7
        %v1225 = vsub.s32 0, %v1224
        %v1226 = vrot.slane %v445, %v1225
        %1227 = vset.pattern.permute.xlu0 0
        %1228 = vperm.xlu0 %1227, %v1226
        %v1229 = vpop.permute.xlu0 %1228
        %v1263 = vunpack.c.l.b16 %v413
        %v1264 = vunpack.c.l.b16 %v414
        %v1265 = vunpack.c.l.b16 %v415
        %v1266 = vunpack.c.l.b16 %v416
        %v1267 = vunpack.c.l.b16 %v417
        %v1268 = vunpack.c.l.b16 %v418
        %v1269 = vunpack.c.l.b16 %v419
        %v1270 = vunpack.c.l.b16 %v420
        %v1271 = vunpack.c.l.b16 %v421
        %v1272 = vunpack.c.l.b16 %v422
        %v1273 = vunpack.c.l.b16 %v423
        %v1274 = vunpack.c.l.b16 %v424
        %v1275 = vunpack.c.l.b16 %v425
        %v1276 = vunpack.c.l.b16 %v426
        %v1277 = vunpack.c.l.b16 %v427
        %v1278 = vunpack.c.l.b16 %v428
        %v1279 = vunpack.c.l.b16 %v429
        %v1280 = vunpack.c.l.b16 %v430
        %v1281 = vunpack.c.l.b16 %v431
        %v1282 = vunpack.c.l.b16 %v432
        %v1283 = vunpack.c.l.b16 %v433
        %v1284 = vunpack.c.l.b16 %v434
        %v1285 = vunpack.c.l.b16 %v435
        %v1286 = vunpack.c.l.b16 %v436
        %v1287 = vunpack.c.l.b16 %v437
        %v1288 = vunpack.c.l.b16 %v438
        %v1289 = vunpack.c.l.b16 %v439
        %v1290 = vunpack.c.l.b16 %v440
        %v1291 = vunpack.c.l.b16 %v441
        %v1292 = vunpack.c.l.b16 %v442
        %v1293 = vunpack.c.l.b16 %v443
        %v1294 = vunpack.c.l.b16 %v444
        %v1295 = vpack.c.b16 %v1264, %v1263
        %v1296 = vpack.c.b16 %v1266, %v1265
        %v1297 = vpack.c.b16 %v1268, %v1267
        %v1298 = vpack.c.b16 %v1270, %v1269
        %v1299 = vpack.c.b16 %v1272, %v1271
        %v1300 = vpack.c.b16 %v1274, %v1273
        %v1301 = vpack.c.b16 %v1276, %v1275
        %v1302 = vpack.c.b16 %v1278, %v1277
        %v1303 = vpack.c.b16 %v1280, %v1279
        %v1304 = vpack.c.b16 %v1282, %v1281
        %v1305 = vpack.c.b16 %v1284, %v1283
        %v1306 = vpack.c.b16 %v1286, %v1285
        %v1307 = vpack.c.b16 %v1288, %v1287
        %v1308 = vpack.c.b16 %v1290, %v1289
        %v1309 = vpack.c.b16 %v1292, %v1291
        %v1310 = vpack.c.b16 %v1294, %v1293
        %1327 = vmatprep.subr.bf16.mxu0 0
        %1328 = vmatpush1.bf16.msra.mxu0 %v1302
        %1329 = vmatprep.subr.bf16.mxu0 0
        %1330 = vmatpush1.bf16.msra.mxu0 %v1301
        %1331 = vmatprep.subr.bf16.mxu0 0
        %1332 = vmatpush1.bf16.msra.mxu0 %v1300
        %1333 = vmatprep.subr.bf16.mxu0 0
        %1334 = vmatpush1.bf16.msra.mxu0 %v1299
        %1335 = vmatprep.subr.bf16.mxu0 0
        %1336 = vmatpush1.bf16.msra.mxu0 %v1298
        %1337 = vmatprep.subr.bf16.mxu0 0
        %1338 = vmatpush1.bf16.msra.mxu0 %v1297
        %1339 = vmatprep.subr.bf16.mxu0 0
        %1340 = vmatpush1.bf16.msra.mxu0 %v1296
        %1341 = vmatprep.subr.bf16.mxu0 0
        %1342 = vmatpush1.bf16.msra.mxu0 %v1295
        %1343 = vmatprep.subr.bf16.mxu0 0
        %1344 = vmatpush2.bf16.msra.mxu0 %v1310
        %1345 = vmatprep.subr.bf16.mxu0 0
        %1346 = vmatpush2.bf16.msra.mxu0 %v1309
        %1347 = vmatprep.subr.bf16.mxu0 0
        %1348 = vmatpush2.bf16.msra.mxu0 %v1308
        %1349 = vmatprep.subr.bf16.mxu0 0
        %1350 = vmatpush2.bf16.msra.mxu0 %v1307
        %1351 = vmatprep.subr.bf16.mxu0 0
        %1352 = vmatpush2.bf16.msra.mxu0 %v1306
        %1353 = vmatprep.subr.bf16.mxu0 0
        %1354 = vmatpush2.bf16.msra.mxu0 %v1305
        %1355 = vmatprep.subr.bf16.mxu0 0
        %1356 = vmatpush2.bf16.msra.mxu0 %v1304
        %1357 = vmatprep.subr.bf16.mxu0 0
        %1358 = vmatpush2.bf16.msra.mxu0 %v1303
        %1359 = vmatprep.mubr.bf16.mxu0 %v1219
        %1360 = vmatmul.mubr.bf16.gmra.mxu0 %v1218
        %v1361 = vpop.f32.mrf.mxu0
        %v1362 = vadd.f32 %v1229, %v1361
        %v1363 = vpop.f32.mrf.mxu0
        %v1364 = vpop.f32.mrf.mxu0
        %v1365 = vadd.f32 %v1229, %v1364
        %v1366 = vpop.f32.mrf.mxu0
        %1367 = vmatprep.mubr.bf16.mxu0 %v1221
        %1368 = vmatmul.mubr.bf16.gmra.mxu0 %v1220
        %v1369 = vpop.f32.mrf.mxu0
        %v1370 = vadd.f32 %v1229, %v1369
        %v1371 = vpop.f32.mrf.mxu0
        %v1372 = vpop.f32.mrf.mxu0
        %v1373 = vadd.f32 %v1229, %v1372
        %v1374 = vpop.f32.mrf.mxu0
        %1375 = vdwg.mxu0
        %vm1376 = vcmask 64512
        %1377 = vst.msk [vmem:[%s312] sm:$0xff] %vm1376, %v1362
        %1378 = vst.msk [vmem:[%s312 + $0x8] sm:$0xff] %vm1376, %v1365
        %1379 = vst.msk [vmem:[%s312 + $0x10] sm:$0xff] %vm1376, %v1370
        %1380 = vst.msk [vmem:[%s312 + $0x18] sm:$0xff] %vm1376, %v1373
        %s1381 = scalar_lea.vmem %s306, 16
        %v1382 = vld [vmem:[%s1381] sm:$0xf]
        %v1383 = vld [vmem:[%s1381 + $0x4] sm:$0xf]
        %v1384 = vld [vmem:[%s1381 + $0x8] sm:$0xf]
        %v1385 = vld [vmem:[%s1381 + $0xc] sm:$0xf]
        %v1390 = vunpack.c.l.b16 %v1382
        %v1391 = vunpack.c.l.b16 %v1383
        %v1392 = vunpack.c.l.b16 %v1384
        %v1393 = vunpack.c.l.b16 %v1385
        %v1394 = vpack.c.b16 %v1391, %v1390
        %v1395 = vpack.c.b16 %v1393, %v1392
        %1398 = vmatprep.subr.bf16.mxu0 %v608
        %1399 = vmatpush1.bf16.msra.mxu0 %v607
        %1400 = vmatprep.subr.bf16.mxu0 %v604
        %1401 = vmatpush1.bf16.msra.mxu0 %v603
        %1402 = vmatprep.subr.bf16.mxu0 %v600
        %1403 = vmatpush1.bf16.msra.mxu0 %v599
        %1404 = vmatprep.subr.bf16.mxu0 %v596
        %1405 = vmatpush1.bf16.msra.mxu0 %v595
        %1406 = vmatprep.subr.bf16.mxu0 %v592
        %1407 = vmatpush1.bf16.msra.mxu0 %v591
        %1408 = vmatprep.subr.bf16.mxu0 %v588
        %1409 = vmatpush1.bf16.msra.mxu0 %v587
        %1410 = vmatprep.subr.bf16.mxu0 %v584
        %1411 = vmatpush1.bf16.msra.mxu0 %v583
        %1412 = vmatprep.subr.bf16.mxu0 %v580
        %1413 = vmatpush1.bf16.msra.mxu0 %v579
        %1414 = vmatprep.subr.bf16.mxu0 0
        %1415 = vmatpush2.bf16.msra.mxu0 0
        %1416 = vmatprep.subr.bf16.mxu0 0
        %1417 = vmatpush2.bf16.msra.mxu0 0
        %1418 = vmatprep.subr.bf16.mxu0 0
        %1419 = vmatpush2.bf16.msra.mxu0 0
        %1420 = vmatprep.subr.bf16.mxu0 0
        %1421 = vmatpush2.bf16.msra.mxu0 0
        %1422 = vmatprep.subr.bf16.mxu0 0
        %1423 = vmatpush2.bf16.msra.mxu0 0
        %1424 = vmatprep.subr.bf16.mxu0 0
        %1425 = vmatpush2.bf16.msra.mxu0 0
        %1426 = vmatprep.subr.bf16.mxu0 0
        %1427 = vmatpush2.bf16.msra.mxu0 0
        %1428 = vmatprep.subr.bf16.mxu0 0
        %1429 = vmatpush2.bf16.msra.mxu0 0
        %1430 = vmatprep.mubr.bf16.mxu0 0
        %1431 = vmatmul.mubr.bf16.gmra.mxu0 %v1394
        %v1432 = vpop.f32.mrf.mxu0
        %v1433 = vadd.f32 %v454, %v1432
        %v1434 = vpop.f32.mrf.mxu0
        %v1435 = vadd.f32 %v458, %v1434
        %v1436 = vpop.f32.mrf.mxu0
        %v1437 = vadd.f32 %v454, %v1436
        %v1438 = vpop.f32.mrf.mxu0
        %v1439 = vadd.f32 %v458, %v1438
        %1440 = vmatprep.mubr.bf16.mxu0 0
        %1441 = vmatmul.mubr.bf16.gmra.mxu0 %v1395
        %v1442 = vpop.f32.mrf.mxu0
        %v1443 = vadd.f32 %v454, %v1442
        %v1444 = vpop.f32.mrf.mxu0
        %v1445 = vadd.f32 %v458, %v1444
        %v1446 = vpop.f32.mrf.mxu0
        %v1447 = vadd.f32 %v454, %v1446
        %v1448 = vpop.f32.mrf.mxu0
        %v1449 = vadd.f32 %v458, %v1448
        %1450 = vdwg.mxu0
        %1451 = vmatprep.subr.bf16.mxu0 %v610
        %1452 = vmatpush1.bf16.msra.mxu0 %v609
        %1453 = vmatprep.subr.bf16.mxu0 %v606
        %1454 = vmatpush1.bf16.msra.mxu0 %v605
        %1455 = vmatprep.subr.bf16.mxu0 %v602
        %1456 = vmatpush1.bf16.msra.mxu0 %v601
        %1457 = vmatprep.subr.bf16.mxu0 %v598
        %1458 = vmatpush1.bf16.msra.mxu0 %v597
        %1459 = vmatprep.subr.bf16.mxu0 %v594
        %1460 = vmatpush1.bf16.msra.mxu0 %v593
        %1461 = vmatprep.subr.bf16.mxu0 %v590
        %1462 = vmatpush1.bf16.msra.mxu0 %v589
        %1463 = vmatprep.subr.bf16.mxu0 %v586
        %1464 = vmatpush1.bf16.msra.mxu0 %v585
        %1465 = vmatprep.subr.bf16.mxu0 %v582
        %1466 = vmatpush1.bf16.msra.mxu0 %v581
        %1467 = vmatprep.subr.bf16.mxu0 0
        %1468 = vmatpush2.bf16.msra.mxu0 0
        %1469 = vmatprep.subr.bf16.mxu0 0
        %1470 = vmatpush2.bf16.msra.mxu0 0
        %1471 = vmatprep.subr.bf16.mxu0 0
        %1472 = vmatpush2.bf16.msra.mxu0 0
        %1473 = vmatprep.subr.bf16.mxu0 0
        %1474 = vmatpush2.bf16.msra.mxu0 0
        %1475 = vmatprep.subr.bf16.mxu0 0
        %1476 = vmatpush2.bf16.msra.mxu0 0
        %1477 = vmatprep.subr.bf16.mxu0 0
        %1478 = vmatpush2.bf16.msra.mxu0 0
        %1479 = vmatprep.subr.bf16.mxu0 0
        %1480 = vmatpush2.bf16.msra.mxu0 0
        %1481 = vmatprep.subr.bf16.mxu0 0
        %1482 = vmatpush2.bf16.msra.mxu0 0
        %1483 = vmatprep.mubr.bf16.mxu0 0
        %1484 = vmatmul.mubr.bf16.gmra.mxu0 %v1394
        %v1485 = vpop.f32.mrf.mxu0
        %v1486 = vadd.f32 %v462, %v1485
        %v1487 = vpop.f32.mrf.mxu0
        %v1488 = vadd.f32 %v466, %v1487
        %v1489 = vpop.f32.mrf.mxu0
        %v1490 = vadd.f32 %v462, %v1489
        %v1491 = vpop.f32.mrf.mxu0
        %v1492 = vadd.f32 %v466, %v1491
        %1493 = vmatprep.mubr.bf16.mxu0 0
        %1494 = vmatmul.mubr.bf16.gmra.mxu0 %v1395
        %v1495 = vpop.f32.mrf.mxu0
        %v1496 = vadd.f32 %v462, %v1495
        %v1497 = vpop.f32.mrf.mxu0
        %v1498 = vadd.f32 %v466, %v1497
        %v1499 = vpop.f32.mrf.mxu0
        %v1500 = vadd.f32 %v462, %v1499
        %v1501 = vpop.f32.mrf.mxu0
        %v1502 = vadd.f32 %v466, %v1501
        %1503 = vdwg.mxu0
        %v1504 = vmax.f32 %v1433, 0.0
        %v1505 = vmax.f32 %v1435, 0.0
        %v1506 = vmax.f32 %v1486, 0.0
        %v1507 = vmax.f32 %v1488, 0.0
        %v1508 = vmax.f32 %v1437, 0.0
        %v1509 = vmax.f32 %v1439, 0.0
        %v1510 = vmax.f32 %v1490, 0.0
        %v1511 = vmax.f32 %v1492, 0.0
        %v1512 = vmax.f32 %v1443, 0.0
        %v1513 = vmax.f32 %v1445, 0.0
        %v1514 = vmax.f32 %v1496, 0.0
        %v1515 = vmax.f32 %v1498, 0.0
        %v1516 = vmax.f32 %v1447, 0.0
        %v1517 = vmax.f32 %v1449, 0.0
        %v1518 = vmax.f32 %v1500, 0.0
        %v1519 = vmax.f32 %v1502, 0.0
        %v1520 = vpack.c.bf16 %v1508, %v1504
        %v1521 = vpack.c.bf16 %v1509, %v1505
        %v1522 = vpack.c.bf16 %v1510, %v1506
        %v1523 = vpack.c.bf16 %v1511, %v1507
        %v1524 = vpack.c.bf16 %v1516, %v1512
        %v1525 = vpack.c.bf16 %v1517, %v1513
        %v1526 = vpack.c.bf16 %v1518, %v1514
        %v1527 = vpack.c.bf16 %v1519, %v1515
        %1528 = vmatprep.subr.bf16.mxu0 %v991
        %1529 = vmatpush1.bf16.msra.mxu0 %v990
        %1530 = vmatprep.subr.bf16.mxu0 %v989
        %1531 = vmatpush1.bf16.msra.mxu0 %v988
        %1532 = vmatprep.subr.bf16.mxu0 %v987
        %1533 = vmatpush1.bf16.msra.mxu0 %v986
        %1534 = vmatprep.subr.bf16.mxu0 %v985
        %1535 = vmatpush1.bf16.msra.mxu0 %v984
        %1536 = vmatprep.subr.bf16.mxu0 %v983
        %1537 = vmatpush1.bf16.msra.mxu0 %v982
        %1538 = vmatprep.subr.bf16.mxu0 %v981
        %1539 = vmatpush1.bf16.msra.mxu0 %v980
        %1540 = vmatprep.subr.bf16.mxu0 %v979
        %1541 = vmatpush1.bf16.msra.mxu0 %v978
        %1542 = vmatprep.subr.bf16.mxu0 %v977
        %1543 = vmatpush1.bf16.msra.mxu0 %v976
        %1544 = vmatprep.subr.bf16.mxu0 %v1007
        %1545 = vmatpush2.bf16.msra.mxu0 %v1006
        %1546 = vmatprep.subr.bf16.mxu0 %v1005
        %1547 = vmatpush2.bf16.msra.mxu0 %v1004
        %1548 = vmatprep.subr.bf16.mxu0 %v1003
        %1549 = vmatpush2.bf16.msra.mxu0 %v1002
        %1550 = vmatprep.subr.bf16.mxu0 %v1001
        %1551 = vmatpush2.bf16.msra.mxu0 %v1000
        %1552 = vmatprep.subr.bf16.mxu0 %v999
        %1553 = vmatpush2.bf16.msra.mxu0 %v998
        %1554 = vmatprep.subr.bf16.mxu0 %v997
        %1555 = vmatpush2.bf16.msra.mxu0 %v996
        %1556 = vmatprep.subr.bf16.mxu0 %v995
        %1557 = vmatpush2.bf16.msra.mxu0 %v994
        %1558 = vmatprep.subr.bf16.mxu0 %v993
        %1559 = vmatpush2.bf16.msra.mxu0 %v992
        %1560 = vmatprep.mubr.bf16.mxu0 %v1521
        %1561 = vmatmul.mubr.bf16.gmra.mxu0 %v1520
        %v1562 = vpop.f32.mrf.mxu0
        %v1563 = vadd.f32 %v777, %v1562
        %v1564 = vpop.f32.mrf.mxu0
        %v1565 = vadd.f32 %v781, %v1564
        %v1566 = vpop.f32.mrf.mxu0
        %v1567 = vadd.f32 %v777, %v1566
        %v1568 = vpop.f32.mrf.mxu0
        %v1569 = vadd.f32 %v781, %v1568
        %1570 = vmatprep.mubr.bf16.mxu0 %v1525
        %1571 = vmatmul.mubr.bf16.gmra.mxu0 %v1524
        %v1572 = vpop.f32.mrf.mxu0
        %v1573 = vadd.f32 %v777, %v1572
        %v1574 = vpop.f32.mrf.mxu0
        %v1575 = vadd.f32 %v781, %v1574
        %v1576 = vpop.f32.mrf.mxu0
        %v1577 = vadd.f32 %v777, %v1576
        %v1578 = vpop.f32.mrf.mxu0
        %v1579 = vadd.f32 %v781, %v1578
        %1580 = vdwg.mxu0
        %1581 = vmatprep.subr.bf16.mxu0 %v1023
        %1582 = vmatpush1.bf16.msra.mxu0 %v1022
        %1583 = vmatprep.subr.bf16.mxu0 %v1021
        %1584 = vmatpush1.bf16.msra.mxu0 %v1020
        %1585 = vmatprep.subr.bf16.mxu0 %v1019
        %1586 = vmatpush1.bf16.msra.mxu0 %v1018
        %1587 = vmatprep.subr.bf16.mxu0 %v1017
        %1588 = vmatpush1.bf16.msra.mxu0 %v1016
        %1589 = vmatprep.subr.bf16.mxu0 %v1015
        %1590 = vmatpush1.bf16.msra.mxu0 %v1014
        %1591 = vmatprep.subr.bf16.mxu0 %v1013
        %1592 = vmatpush1.bf16.msra.mxu0 %v1012
        %1593 = vmatprep.subr.bf16.mxu0 %v1011
        %1594 = vmatpush1.bf16.msra.mxu0 %v1010
        %1595 = vmatprep.subr.bf16.mxu0 %v1009
        %1596 = vmatpush1.bf16.msra.mxu0 %v1008
        %1597 = vmatprep.subr.bf16.mxu0 %v1039
        %1598 = vmatpush2.bf16.msra.mxu0 %v1038
        %1599 = vmatprep.subr.bf16.mxu0 %v1037
        %1600 = vmatpush2.bf16.msra.mxu0 %v1036
        %1601 = vmatprep.subr.bf16.mxu0 %v1035
        %1602 = vmatpush2.bf16.msra.mxu0 %v1034
        %1603 = vmatprep.subr.bf16.mxu0 %v1033
        %1604 = vmatpush2.bf16.msra.mxu0 %v1032
        %1605 = vmatprep.subr.bf16.mxu0 %v1031
        %1606 = vmatpush2.bf16.msra.mxu0 %v1030
        %1607 = vmatprep.subr.bf16.mxu0 %v1029
        %1608 = vmatpush2.bf16.msra.mxu0 %v1028
        %1609 = vmatprep.subr.bf16.mxu0 %v1027
        %1610 = vmatpush2.bf16.msra.mxu0 %v1026
        %1611 = vmatprep.subr.bf16.mxu0 %v1025
        %1612 = vmatpush2.bf16.msra.mxu0 %v1024
        %1613 = vmatprep.mubr.bf16.mxu0 %v1523
        %1614 = vmatmul.mubr.bf16.gmra.mxu0 %v1522
        %v1615 = vpop.f32.mrf.mxu0
        %v1616 = vadd.f32 %v1563, %v1615
        %v1617 = vpop.f32.mrf.mxu0
        %v1618 = vadd.f32 %v1565, %v1617
        %v1619 = vpop.f32.mrf.mxu0
        %v1620 = vadd.f32 %v1567, %v1619
        %v1621 = vpop.f32.mrf.mxu0
        %v1622 = vadd.f32 %v1569, %v1621
        %1623 = vmatprep.mubr.bf16.mxu0 %v1527
        %1624 = vmatmul.mubr.bf16.gmra.mxu0 %v1526
        %v1625 = vpop.f32.mrf.mxu0
        %v1626 = vadd.f32 %v1573, %v1625
        %v1627 = vpop.f32.mrf.mxu0
        %v1628 = vadd.f32 %v1575, %v1627
        %v1629 = vpop.f32.mrf.mxu0
        %v1630 = vadd.f32 %v1577, %v1629
        %v1631 = vpop.f32.mrf.mxu0
        %v1632 = vadd.f32 %v1579, %v1631
        %1633 = vdwg.mxu0
        %v1634 = vmax.f32 %v1616, 0.0
        %v1635 = vmax.f32 %v1618, 0.0
        %v1636 = vmax.f32 %v1620, 0.0
        %v1637 = vmax.f32 %v1622, 0.0
        %v1638 = vmax.f32 %v1626, 0.0
        %v1639 = vmax.f32 %v1628, 0.0
        %v1640 = vmax.f32 %v1630, 0.0
        %v1641 = vmax.f32 %v1632, 0.0
        %v1642 = vpack.c.bf16 %v1636, %v1634
        %v1643 = vpack.c.bf16 %v1637, %v1635
        %v1644 = vpack.c.bf16 %v1640, %v1638
        %v1645 = vpack.c.bf16 %v1641, %v1639
        %1646 = vmatprep.subr.bf16.mxu0 0
        %1647 = vmatpush1.bf16.msra.mxu0 %v1302
        %1648 = vmatprep.subr.bf16.mxu0 0
        %1649 = vmatpush1.bf16.msra.mxu0 %v1301
        %1650 = vmatprep.subr.bf16.mxu0 0
        %1651 = vmatpush1.bf16.msra.mxu0 %v1300
        %1652 = vmatprep.subr.bf16.mxu0 0
        %1653 = vmatpush1.bf16.msra.mxu0 %v1299
        %1654 = vmatprep.subr.bf16.mxu0 0
        %1655 = vmatpush1.bf16.msra.mxu0 %v1298
        %1656 = vmatprep.subr.bf16.mxu0 0
        %1657 = vmatpush1.bf16.msra.mxu0 %v1297
        %1658 = vmatprep.subr.bf16.mxu0 0
        %1659 = vmatpush1.bf16.msra.mxu0 %v1296
        %1660 = vmatprep.subr.bf16.mxu0 0
        %1661 = vmatpush1.bf16.msra.mxu0 %v1295
        %1662 = vmatprep.subr.bf16.mxu0 0
        %1663 = vmatpush2.bf16.msra.mxu0 %v1310
        %1664 = vmatprep.subr.bf16.mxu0 0
        %1665 = vmatpush2.bf16.msra.mxu0 %v1309
        %1666 = vmatprep.subr.bf16.mxu0 0
        %1667 = vmatpush2.bf16.msra.mxu0 %v1308
        %1668 = vmatprep.subr.bf16.mxu0 0
        %1669 = vmatpush2.bf16.msra.mxu0 %v1307
        %1670 = vmatprep.subr.bf16.mxu0 0
        %1671 = vmatpush2.bf16.msra.mxu0 %v1306
        %1672 = vmatprep.subr.bf16.mxu0 0
        %1673 = vmatpush2.bf16.msra.mxu0 %v1305
        %1674 = vmatprep.subr.bf16.mxu0 0
        %1675 = vmatpush2.bf16.msra.mxu0 %v1304
        %1676 = vmatprep.subr.bf16.mxu0 0
        %1677 = vmatpush2.bf16.msra.mxu0 %v1303
        %1678 = vmatprep.mubr.bf16.mxu0 %v1643
        %1679 = vmatmul.mubr.bf16.gmra.mxu0 %v1642
        %v1680 = vpop.f32.mrf.mxu0
        %v1681 = vadd.f32 %v1229, %v1680
        %v1682 = vpop.f32.mrf.mxu0
        %v1683 = vpop.f32.mrf.mxu0
        %v1684 = vadd.f32 %v1229, %v1683
        %v1685 = vpop.f32.mrf.mxu0
        %1686 = vmatprep.mubr.bf16.mxu0 %v1645
        %1687 = vmatmul.mubr.bf16.gmra.mxu0 %v1644
        %v1688 = vpop.f32.mrf.mxu0
        %v1689 = vadd.f32 %v1229, %v1688
        %v1690 = vpop.f32.mrf.mxu0
        %v1691 = vpop.f32.mrf.mxu0
        %v1692 = vadd.f32 %v1229, %v1691
        %v1693 = vpop.f32.mrf.mxu0
        %1694 = vdwg.mxu0
        %s1695 = scalar_lea.vmem %s312, 32
        %1696 = vst.msk [vmem:[%s1695] sm:$0xff] %vm1376, %v1681
        %1697 = vst.msk [vmem:[%s1695 + $0x8] sm:$0xff] %vm1376, %v1684
        %1698 = vst.msk [vmem:[%s1695 + $0x10] sm:$0xff] %vm1376, %v1689
        %1699 = vst.msk [vmem:[%s1695 + $0x18] sm:$0xff] %vm1376, %v1692
        %s1700 = smul.u32 8, %s22
        %p1701 = scmp.lt.s32.totalorder %s1700, 15
        %s1702 = scalar_select %p1701, %s1700, 15
        %s1703 = smul.addr %s1702, 8
        %s1704 = scalar_lea.vmem %s7, %s1703
        // Predicated region
        $region57: #{tpu_custom_call.1} parent=47 // pred_check
          %p1705 = pneg %p192
        $region58: #{tpu_custom_call.1} parent=47 // pred_check_branch
          %1707 = sbr.rel (%p1705) target = $region60
        $region59: #{tpu_custom_call.1} parent=47 // pred_region
          %s1708 = smul.u32 8, %s22
        $region60: #{tpu_custom_call.1} parent=47 // pred_fallthru
          _
      $region48: #{tpu_custom_call.1} parent=5 // pred_fallthru
        _
      %p1709 = scmp.le.s32.totalorder 2, %s17
      // Predicated region
      $region61: #{tpu_custom_call.1} parent=5 // pred_check
        %p1710 = pneg %p1709
      $region62: #{tpu_custom_call.1} parent=5 // pred_check_branch
        %1712 = sbr.rel (%p1710) target = $region64
      $region63: #{tpu_custom_call.1} parent=5 // pred_region
        %s1713 = ssub.s32 %s17, 2
        // Predicated region
        $region65: #{tpu_custom_call.1} parent=63 // pred_check
          %p1714 = pneg %p198
        $region66: #{tpu_custom_call.1} parent=63 // pred_check_branch
          %1716 = sbr.rel (%p1714) target = $region68
        $region67: #{tpu_custom_call.1} parent=63 // pred_region
          %s1717 = smul.u32 8, %s23
          %p1718 = scmp.lt.s32.totalorder %s1717, 15
          %s1719 = scalar_select %p1718, %s1717, 15
          %s1720 = smul.addr %s1719, 8
          %s1721 = scalar_lea.vmem %s7, %s1720
        $region68: #{tpu_custom_call.1} parent=63 // pred_fallthru
          _
      $region64: #{tpu_custom_call.1} parent=5 // pred_fallthru
        _
    $region6: #{tpu_custom_call.1} parent=1 // loop_footer
      %s21 = sadd.s32 1, %s17
    $region7: #{tpu_custom_call.1} parent=1 // loop_footer_branch
      %16 = sbr.rel target = $region3
    $region8: #{tpu_custom_call.1} parent=1 // loop_exit
      _
    %1722 = vsyncpa [#allocation4], 1
    %s1723 = scalar_lea.sflag [#allocation4], 1
    %1724 = vsyncpa %s1723, 1
    %1725 = vsyncpa [#allocation6], 1

</llo_original>
